<compile_context>
chip_gen: v6e
topology: v6e:2x2x1
jax: 0.10.0
libtpu: 0.0.40
codegen_flags: <defaults>
</compile_context>

<pallas_src>
import math

import jax
import jax.numpy as jnp
from jax.experimental import pallas as pl
from jax.experimental.pallas import tpu as pltpu


def _round_up(x, m):
    return pl.cdiv(x, m) * m


def decoder_kernel(x_ref, w1_ref, b1_ref, w2_ref, b2_ref, w3_ref, b3_ref, o_ref):
    # x_ref: (TB, d_in) bf16   w*: bf16   b*: f32 (1, out)   o_ref: (TB, d_out) f32
    x = x_ref[...]

    # Layer 1: bf16 matmul on the MXU, f32 accumulate, f32 bias + ReLU.
    h1 = jnp.dot(x, w1_ref[...], preferred_element_type=jnp.float32) + b1_ref[...]
    h1 = jnp.maximum(h1, 0.0).astype(w2_ref.dtype)

    # Layer 2.
    h2 = jnp.dot(h1, w2_ref[...], preferred_element_type=jnp.float32) + b2_ref[...]
    h2 = jnp.maximum(h2, 0.0).astype(w3_ref.dtype)

    # Layer 3 + sigmoid (EUP path), stored f32 lane-dense.
    logits = jnp.dot(h2, w3_ref[...], preferred_element_type=jnp.float32) + b3_ref[...]
    o_ref[...] = jax.nn.sigmoid(logits)


def decoder_forward(x, params, *, block_batch=128):
    """x: [B, in_features * n_classes] -> [B, img_h * img_w] float32.

    block_batch: batch tile size. 128 fills the v5e MXU (4x128x128); use 256 on
    v7x/v6e (2x256x256) for large batches if desired.
    """
    w1, b1, w2, b2, w3, b3 = params
    batch, d_in = x.shape
    d_out = w3.shape[1]

    # --- lane-align the output width (avoid masked partial stores) ----------
    d_out_p = int(_round_up(d_out, 128))
    if d_out_p != d_out:
        w3 = jnp.pad(w3, ((0, 0), (0, d_out_p - d_out)))
        b3 = jnp.pad(b3, ((0, 0), (0, d_out_p - d_out)))

    # --- sublane-align / tile the batch dimension ---------------------------
    tb = int(min(block_batch, _round_up(batch, 8)))
    batch_p = int(_round_up(batch, tb))
    if batch_p != batch:
        x = jnp.pad(x, ((0, batch_p - batch), (0, 0)))

    # bf16 feed for the MXU (f32 accumulation inside the kernel).
    x_bf = x.astype(jnp.bfloat16)
    w1 = w1.astype(jnp.bfloat16)
    w2 = w2.astype(jnp.bfloat16)
    w3 = w3.astype(jnp.bfloat16)
    b1 = b1.astype(jnp.float32)
    b2 = b2.astype(jnp.float32)
    b3 = b3.astype(jnp.float32)

    grid = (batch_p // tb,)

    # Weights/biases: full-array blocks with a constant index_map -> resident
    # in VMEM across all batch tiles (single DMA per call).
    def _resident(shape):
        return pl.BlockSpec(shape, lambda i: (0,) * len(shape))

    out_p = pl.pallas_call(
        decoder_kernel,
        out_shape=jax.ShapeDtypeStruct((batch_p, d_out_p), jnp.float32),
        grid_spec=pltpu.PrefetchScalarGridSpec(
            num_scalar_prefetch=0,
            grid=grid,
            in_specs=[
                pl.BlockSpec((tb, d_in), lambda i: (i, 0)),  # x tile (pipelined)
                _resident(w1.shape), _resident(b1.shape),
                _resident(w2.shape), _resident(b2.shape),
                _resident(w3.shape), _resident(b3.shape),
            ],
            out_specs=pl.BlockSpec((tb, d_out_p), lambda i: (i, 0)),
        ),
        compiler_params=pltpu.CompilerParams(
            dimension_semantics=("parallel",),  # batch tiles independent -> megacore
        ),
    )(x_bf, w1, b1, w2, b2, w3, b3)

    # Strip batch / lane padding.
    return out_p[:batch, :d_out]


def init_linear(key, in_dim, out_dim):
    # Deterministic PyTorch-style init: U(-1/sqrt(in_dim), 1/sqrt(in_dim)).
    kw, kb = jax.random.split(key)
    bound = 1.0 / math.sqrt(in_dim)
    w = jax.random.uniform(kw, (in_dim, out_dim), jnp.float32, -bound, bound)
    b = jax.random.uniform(kb, (1, out_dim), jnp.float32, -bound, bound)
    return w, b


def make_decoder_params(key, in_features, n_classes, img_height, img_width):
    d_in = in_features * n_classes
    d_out = img_height * img_width
    k1, k2, k3 = jax.random.split(key, 3)
    w1, b1 = init_linear(k1, d_in, 512)
    w2, b2 = init_linear(k2, 512, 1024)
    w3, b3 = init_linear(k3, 1024, d_out)
    return (w1, b1, w2, b2, w3, b3)


def reference_forward(x, params):
    """Reference that mirrors the kernel's dtype path (bf16 MXU operands,
    f32 accumulation / bias / activations), so the comparison isolates the
    Pallas lowering rather than bf16 rounding of the weights."""
    w1, b1, w2, b2, w3, b3 = params
    xb = x.astype(jnp.bfloat16)
    w1b, w2b, w3b = (w.astype(jnp.bfloat16) for w in (w1, w2, w3))
    h1 = jnp.dot(xb, w1b, preferred_element_type=jnp.float32) + b1
    h1 = jnp.maximum(h1, 0.0).astype(jnp.bfloat16)
    h2 = jnp.dot(h1, w2b, preferred_element_type=jnp.float32) + b2
    h2 = jnp.maximum(h2, 0.0).astype(jnp.bfloat16)
    logits = jnp.dot(h2, w3b, preferred_element_type=jnp.float32) + b3
    return jax.nn.sigmoid(logits)


if __name__ == "__main__":
    # Small, forward-consistent shapes: in_features=8, n_classes=4 -> 32-dim
    # capsule input; reconstruct a 16x16 image (256 outputs).
    batch = 2
    in_features = 8
    n_classes = 4
    img_h = img_w = 16

    key = jax.random.PRNGKey(0)
    kx, kp = jax.random.split(key)

    x = jax.random.normal(kx, (batch, in_features * n_classes), jnp.float32)
    params = make_decoder_params(kp, in_features, n_classes, img_h, img_w)

    out = decoder_forward(x, params)
    out = jax.block_until_ready(out)

    ref = reference_forward(x, params)
    assert out.shape == (batch, img_h * img_w), out.shape
    assert jnp.allclose(out, ref, atol=1e-3, rtol=1e-3), "mismatch vs reference"

    print("KERNEL_OK")
</pallas_src>

<mosaic_0001>
module attributes {stable_mosaic.version = 11 : i64} {
  func.func @decoder_kernel(%arg0: i32, %arg1: memref<8x32xbf16, #tpu.memory_space<vmem>>, %arg2: memref<32x512xbf16, #tpu.memory_space<vmem>>, %arg3: memref<1x512xf32, #tpu.memory_space<vmem>>, %arg4: memref<512x1024xbf16, #tpu.memory_space<vmem>>, %arg5: memref<1x1024xf32, #tpu.memory_space<vmem>>, %arg6: memref<1024x256xbf16, #tpu.memory_space<vmem>>, %arg7: memref<1x256xf32, #tpu.memory_space<vmem>>, %arg8: memref<8x256xf32, #tpu.memory_space<vmem>>) attributes {dimension_semantics = [#tpu.dimension_semantics<parallel>], iteration_bounds = array<i64: 1>, scalar_prefetch = 0 : i64, scratch_operands = 0 : i64, tpu.core_type = #tpu.core_type<tc>, window_params = [{transform_indices = @transform_0, window_bounds = array<i64: 8, 32>}, {pipeline_mode = #tpu.pipeline_mode<synchronous>, transform_indices = @transform_1, window_bounds = array<i64: 32, 512>}, {pipeline_mode = #tpu.pipeline_mode<synchronous>, transform_indices = @transform_2, window_bounds = array<i64: 1, 512>}, {pipeline_mode = #tpu.pipeline_mode<synchronous>, transform_indices = @transform_3, window_bounds = array<i64: 512, 1024>}, {pipeline_mode = #tpu.pipeline_mode<synchronous>, transform_indices = @transform_4, window_bounds = array<i64: 1, 1024>}, {pipeline_mode = #tpu.pipeline_mode<synchronous>, transform_indices = @transform_5, window_bounds = array<i64: 1024, 256>}, {pipeline_mode = #tpu.pipeline_mode<synchronous>, transform_indices = @transform_6, window_bounds = array<i64: 1, 256>}, {transform_indices = @transform_7, window_bounds = array<i64: 8, 256>}]} {
    %c0 = arith.constant 0 : index
    %c0_0 = arith.constant 0 : index
    %0 = vector.load %arg1[%c0, %c0_0] : memref<8x32xbf16, #tpu.memory_space<vmem>>, vector<8x32xbf16>
    %c0_1 = arith.constant 0 : index
    %c0_2 = arith.constant 0 : index
    %1 = vector.load %arg2[%c0_1, %c0_2] : memref<32x512xbf16, #tpu.memory_space<vmem>>, vector<32x512xbf16>
    %cst = arith.constant dense<0.000000e+00> : vector<8x512xf32>
    %2 = tpu.matmul %0, %1, %cst {dimension_numbers = #tpu.dot_dimension_numbers<[1], [0], [0], [1], [0, 0, 1, 1], [], []>} : vector<8x32xbf16>, vector<32x512xbf16>, vector<8x512xf32> -> vector<8x512xf32>
    %c0_3 = arith.constant 0 : index
    %c0_4 = arith.constant 0 : index
    %3 = vector.load %arg3[%c0_3, %c0_4] : memref<1x512xf32, #tpu.memory_space<vmem>>, vector<1x512xf32>
    %4 = vector.broadcast %3 : vector<1x512xf32> to vector<8x512xf32>
    %5 = arith.addf %2, %4 : vector<8x512xf32>
    %cst_5 = arith.constant 0.000000e+00 : f32
    %6 = vector.broadcast %cst_5 : f32 to vector<8x512xf32>
    %7 = arith.maximumf %5, %6 : vector<8x512xf32>
    %8 = arith.truncf %7 : vector<8x512xf32> to vector<8x512xbf16>
    %c0_6 = arith.constant 0 : index
    %c0_7 = arith.constant 0 : index
    %9 = vector.load %arg4[%c0_6, %c0_7] : memref<512x1024xbf16, #tpu.memory_space<vmem>>, vector<512x1024xbf16>
    %cst_8 = arith.constant dense<0.000000e+00> : vector<8x1024xf32>
    %10 = tpu.matmul %8, %9, %cst_8 {dimension_numbers = #tpu.dot_dimension_numbers<[1], [0], [0], [1], [0, 0, 1, 1], [], []>} : vector<8x512xbf16>, vector<512x1024xbf16>, vector<8x1024xf32> -> vector<8x1024xf32>
    %c0_9 = arith.constant 0 : index
    %c0_10 = arith.constant 0 : index
    %11 = vector.load %arg5[%c0_9, %c0_10] : memref<1x1024xf32, #tpu.memory_space<vmem>>, vector<1x1024xf32>
    %12 = vector.broadcast %11 : vector<1x1024xf32> to vector<8x1024xf32>
    %13 = arith.addf %10, %12 : vector<8x1024xf32>
    %cst_11 = arith.constant 0.000000e+00 : f32
    %14 = vector.broadcast %cst_11 : f32 to vector<8x1024xf32>
    %15 = arith.maximumf %13, %14 : vector<8x1024xf32>
    %16 = arith.truncf %15 : vector<8x1024xf32> to vector<8x1024xbf16>
    %c0_12 = arith.constant 0 : index
    %c0_13 = arith.constant 0 : index
    %17 = vector.load %arg6[%c0_12, %c0_13] : memref<1024x256xbf16, #tpu.memory_space<vmem>>, vector<1024x256xbf16>
    %cst_14 = arith.constant dense<0.000000e+00> : vector<8x256xf32>
    %18 = tpu.matmul %16, %17, %cst_14 {dimension_numbers = #tpu.dot_dimension_numbers<[1], [0], [0], [1], [0, 0, 1, 1], [], []>} : vector<8x1024xbf16>, vector<1024x256xbf16>, vector<8x256xf32> -> vector<8x256xf32>
    %c0_15 = arith.constant 0 : index
    %c0_16 = arith.constant 0 : index
    %19 = vector.load %arg7[%c0_15, %c0_16] : memref<1x256xf32, #tpu.memory_space<vmem>>, vector<1x256xf32>
    %20 = vector.broadcast %19 : vector<1x256xf32> to vector<8x256xf32>
    %21 = arith.addf %18, %20 : vector<8x256xf32>
    %22 = arith.negf %21 : vector<8x256xf32>
    %23 = math.exp %22 : vector<8x256xf32>
    %cst_17 = arith.constant 1.000000e+00 : f32
    %24 = vector.broadcast %cst_17 : f32 to vector<8x256xf32>
    %25 = arith.addf %24, %23 : vector<8x256xf32>
    %26 = arith.divf %24, %25 : vector<8x256xf32>
    %c0_18 = arith.constant 0 : index
    %c0_19 = arith.constant 0 : index
    %27 = vector.load %arg8[%c0_18, %c0_19] : memref<8x256xf32, #tpu.memory_space<vmem>>, vector<8x256xf32>
    tpu.vector_store %arg8[%c0_18, %c0_19], %26 {strides = array<i32>} : memref<8x256xf32, #tpu.memory_space<vmem>>, vector<8x256xf32>,
    return
  }
  func.func @transform_0(%arg0: i32) -> (i32, i32) {
    %c0_i32 = arith.constant 0 : i32
    %c0_i32_0 = arith.constant 0 : i32
    return %arg0, %c0_i32 : i32, i32
  }
  func.func @transform_1(%arg0: i32) -> (i32, i32) {
    %c0_i32 = arith.constant 0 : i32
    %c0_i32_0 = arith.constant 0 : i32
    %c0_i32_1 = arith.constant 0 : i32
    return %c0_i32, %c0_i32_0 : i32, i32
  }
  func.func @transform_2(%arg0: i32) -> (i32, i32) {
    %c0_i32 = arith.constant 0 : i32
    %c0_i32_0 = arith.constant 0 : i32
    %c0_i32_1 = arith.constant 0 : i32
    return %c0_i32, %c0_i32_0 : i32, i32
  }
  func.func @transform_3(%arg0: i32) -> (i32, i32) {
    %c0_i32 = arith.constant 0 : i32
    %c0_i32_0 = arith.constant 0 : i32
    %c0_i32_1 = arith.constant 0 : i32
    return %c0_i32, %c0_i32_0 : i32, i32
  }
  func.func @transform_4(%arg0: i32) -> (i32, i32) {
    %c0_i32 = arith.constant 0 : i32
    %c0_i32_0 = arith.constant 0 : i32
    %c0_i32_1 = arith.constant 0 : i32
    return %c0_i32, %c0_i32_0 : i32, i32
  }
  func.func @transform_5(%arg0: i32) -> (i32, i32) {
    %c0_i32 = arith.constant 0 : i32
    %c0_i32_0 = arith.constant 0 : i32
    %c0_i32_1 = arith.constant 0 : i32
    return %c0_i32, %c0_i32_0 : i32, i32
  }
  func.func @transform_6(%arg0: i32) -> (i32, i32) {
    %c0_i32 = arith.constant 0 : i32
    %c0_i32_0 = arith.constant 0 : i32
    %c0_i32_1 = arith.constant 0 : i32
    return %c0_i32, %c0_i32_0 : i32, i32
  }
  func.func @transform_7(%arg0: i32) -> (i32, i32) {
    %c0_i32 = arith.constant 0 : i32
    %c0_i32_0 = arith.constant 0 : i32
    return %arg0, %c0_i32 : i32, i32
  }
}

</mosaic_0001>

<llo_original>
// kernel: tpu_custom_call.1
$region0: #{tpu_custom_call.1}
  #allocation0 [shape = 'u32[]', space=smem, size = 0x4, offset = 0x4, fixed_abs, tag = 'smem constant byte address 0x4 - core index']
  #allocation1 [shape = 'u32[144,128]{1,0:T(1,128)}', space=vmem, size = 0x12000, scoped, tag = 'internal scratch']
  %s0 = inlined_call_operand.hbm [shape: bf16[8,32], index: 0, kind: input, shape index: {}]
  %s1 = inlined_call_operand.hbm [shape: bf16[32,512], index: 1, kind: input, shape index: {}]
  %s2 = inlined_call_operand.hbm [shape: f32[1,512], index: 2, kind: input, shape index: {}]
  %s3 = inlined_call_operand.hbm [shape: bf16[512,1024], index: 3, kind: input, shape index: {}]
  %s4 = inlined_call_operand.hbm [shape: f32[1,1024], index: 4, kind: input, shape index: {}]
  %s5 = inlined_call_operand.hbm [shape: bf16[1024,256], index: 5, kind: input, shape index: {}]
  %s6 = inlined_call_operand.vmem [shape: f32[1,256], index: 6, kind: input, shape index: {}]
  %s7 = inlined_call_operand.hbm [shape: f32[8,256], index: 7, kind: output, shape index: {}]
  %s8 = sld [smem:[#allocation0]]
  $region62: #{tpu_custom_call.1} parent=0
    _
  %s10 = ssub.s32 1, %s8
  %s11 = scalar_select 0, %s10, %s8
  $region1: #{tpu_custom_call.1} parent=0
    #allocation2 [shape = 'u8[2048]{0}', space=vmem, size = 0x800, scoped, tag = 'input window, operand 0, single buffered']
    #allocation3 [shape = 's32[1]{0}', space=sflag, size = 0x4, scoped, tag = 'scoped memory for tpu_custom_call.1']
    #allocation4 [shape = 's32[1]{0}', space=sflag, size = 0x4, scoped, tag = 'scoped memory for tpu_custom_call.1']
    #allocation5 [shape = 'u8[32768]{0}', space=vmem, size = 0x8000, scoped, tag = 'input window, operand 1, single buffered']
    #allocation6 [shape = 's32[1]{0}', space=sflag, size = 0x4, scoped, tag = 'scoped memory for tpu_custom_call.1']
    #allocation7 [shape = 'u8[2048]{0}', space=vmem, size = 0x800, scoped, tag = 'input window, operand 2, single buffered']
    #allocation8 [shape = 'u8[1048576]{0}', space=vmem, size = 0x100000, scoped, tag = 'input window, operand 3, single buffered']
    #allocation9 [shape = 's32[1]{0}', space=sflag, size = 0x4, scoped, tag = 'scoped memory for tpu_custom_call.1']
    #allocation10 [shape = 'u8[4096]{0}', space=vmem, size = 0x1000, scoped, tag = 'input window, operand 4, single buffered']
    #allocation11 [shape = 'u8[524288]{0}', space=vmem, size = 0x80000, scoped, tag = 'input window, operand 5, single buffered']
    #allocation12 [shape = 's32[1]{0}', space=sflag, size = 0x4, scoped, tag = 'scoped memory for tpu_custom_call.1']
    #allocation13 [shape = 'u8[8192]{0}', space=vmem, size = 0x2000, scoped, tag = 'output window, operand 0, single buffered']
    %12 = vsyncpa [#allocation3], 0
    %13 = vsyncpa [#allocation6], 0
    %14 = vsyncpa [#allocation9], 0
    %15 = vsyncpa [#allocation12], 0
    %16 = vsyncpa [#allocation4], 0
    // Predicated region
    $region2: #{tpu_custom_call.1} parent=1 // pred_check
      _
    $region3: #{tpu_custom_call.1} parent=1 // pred_check_branch
      %18 = sbr.rel (0) target = $region5
    $region4: #{tpu_custom_call.1} parent=1 // pred_region
      %s20 = ssub.s32 64, 64
      %21 = vsyncadd [#allocation3], %s20
      %s23 = sshll.u32 [#allocation2], 4
      %s24 = int_to_ptr.vmem [resolvable:$true] %s23
      %26 = dma.hbm_to_vmem [thread:$0]  %s0, 64, %s24, [#allocation3]
    $region5: #{tpu_custom_call.1} parent=1 // pred_fallthru
      _
    // Predicated region
    $region6: #{tpu_custom_call.1} parent=1 // pred_check
      _
    $region7: #{tpu_custom_call.1} parent=1 // pred_check_branch
      %28 = sbr.rel (0) target = $region9
    $region8: #{tpu_custom_call.1} parent=1 // pred_region
      %s30 = ssub.s32 1024, 1024
      %31 = vsyncadd [#allocation6], %s30
      %s32 = sshll.u32 [#allocation5], 4
      %s33 = int_to_ptr.vmem [resolvable:$true] %s32
      %38 = dma.hbm_to_vmem [thread:$0]  %s1, 1024, %s33, [#allocation6], 256, 256, 16
    $region9: #{tpu_custom_call.1} parent=1 // pred_fallthru
      _
    // Predicated region
    $region10: #{tpu_custom_call.1} parent=1 // pred_check
      _
    $region11: #{tpu_custom_call.1} parent=1 // pred_check_branch
      %40 = sbr.rel (0) target = $region13
    $region12: #{tpu_custom_call.1} parent=1 // pred_region
      %s42 = ssub.s32 64, 64
      %43 = vsyncadd [#allocation6], %s42
      %s45 = sshll.u32 [#allocation7], 4
      %s46 = int_to_ptr.vmem [resolvable:$true] %s45
      %48 = dma.hbm_to_vmem [thread:$0]  %s2, 64, %s46, [#allocation6]
    $region13: #{tpu_custom_call.1} parent=1 // pred_fallthru
      _
    // Predicated region
    $region14: #{tpu_custom_call.1} parent=1 // pred_check
      _
    $region15: #{tpu_custom_call.1} parent=1 // pred_check_branch
      %50 = sbr.rel (0) target = $region17
    $region16: #{tpu_custom_call.1} parent=1 // pred_region
      %s52 = ssub.s32 32768, 32768
      %53 = vsyncadd [#allocation9], %s52
      %s54 = sshll.u32 [#allocation8], 4
      %s55 = int_to_ptr.vmem [resolvable:$true] %s54
      %60 = dma.hbm_to_vmem [thread:$0]  %s3, 32768, %s55, [#allocation9], 512, 512, 32
    $region17: #{tpu_custom_call.1} parent=1 // pred_fallthru
      _
    // Predicated region
    $region18: #{tpu_custom_call.1} parent=1 // pred_check
      _
    $region19: #{tpu_custom_call.1} parent=1 // pred_check_branch
      %62 = sbr.rel (0) target = $region21
    $region20: #{tpu_custom_call.1} parent=1 // pred_region
      %s64 = ssub.s32 128, 128
      %65 = vsyncadd [#allocation9], %s64
      %s67 = sshll.u32 [#allocation10], 4
      %s68 = int_to_ptr.vmem [resolvable:$true] %s67
      %70 = dma.hbm_to_vmem [thread:$0]  %s4, 128, %s68, [#allocation9]
    $region21: #{tpu_custom_call.1} parent=1 // pred_fallthru
      _
    // Predicated region
    $region22: #{tpu_custom_call.1} parent=1 // pred_check
      _
    $region23: #{tpu_custom_call.1} parent=1 // pred_check_branch
      %72 = sbr.rel (0) target = $region25
    $region24: #{tpu_custom_call.1} parent=1 // pred_region
      %s74 = ssub.s32 16384, 16384
      %75 = vsyncadd [#allocation12], %s74
      %s76 = sshll.u32 [#allocation11], 4
      %s77 = int_to_ptr.vmem [resolvable:$true] %s76
      %82 = dma.hbm_to_vmem [thread:$0]  %s5, 16384, %s77, [#allocation12], 128, 128, 8
    $region25: #{tpu_custom_call.1} parent=1 // pred_fallthru
      _
    // Predicated region
    $region26: #{tpu_custom_call.1} parent=1 // pred_check
      _
    $region27: #{tpu_custom_call.1} parent=1 // pred_check_branch
      %84 = sbr.rel (0) target = $region29
    $region28: #{tpu_custom_call.1} parent=1 // pred_region
      _
    $region29: #{tpu_custom_call.1} parent=1 // pred_fallthru
      _
    // Predicated region
    $region30: #{tpu_custom_call.1} parent=1 // pred_check
      _
    $region31: #{tpu_custom_call.1} parent=1 // pred_check_branch
      %86 = sbr.rel (0) target = $region33
    $region32: #{tpu_custom_call.1} parent=1 // pred_region
      %87 = dma.done [#allocation3], 64
    $region33: #{tpu_custom_call.1} parent=1 // pred_fallthru
      _
    // Predicated region
    $region34: #{tpu_custom_call.1} parent=1 // pred_check
      _
    $region35: #{tpu_custom_call.1} parent=1 // pred_check_branch
      %89 = sbr.rel (0) target = $region37
    $region36: #{tpu_custom_call.1} parent=1 // pred_region
      %90 = dma.done [#allocation6], 1024
    $region37: #{tpu_custom_call.1} parent=1 // pred_fallthru
      _
    // Predicated region
    $region38: #{tpu_custom_call.1} parent=1 // pred_check
      _
    $region39: #{tpu_custom_call.1} parent=1 // pred_check_branch
      %92 = sbr.rel (0) target = $region41
    $region40: #{tpu_custom_call.1} parent=1 // pred_region
      %93 = dma.done [#allocation6], 64
    $region41: #{tpu_custom_call.1} parent=1 // pred_fallthru
      _
    // Predicated region
    $region42: #{tpu_custom_call.1} parent=1 // pred_check
      _
    $region43: #{tpu_custom_call.1} parent=1 // pred_check_branch
      %95 = sbr.rel (0) target = $region45
    $region44: #{tpu_custom_call.1} parent=1 // pred_region
      %96 = dma.done [#allocation9], 32768
    $region45: #{tpu_custom_call.1} parent=1 // pred_fallthru
      _
    // Predicated region
    $region46: #{tpu_custom_call.1} parent=1 // pred_check
      _
    $region47: #{tpu_custom_call.1} parent=1 // pred_check_branch
      %98 = sbr.rel (0) target = $region49
    $region48: #{tpu_custom_call.1} parent=1 // pred_region
      %99 = dma.done [#allocation9], 128
    $region49: #{tpu_custom_call.1} parent=1 // pred_fallthru
      _
    // Predicated region
    $region50: #{tpu_custom_call.1} parent=1 // pred_check
      _
    $region51: #{tpu_custom_call.1} parent=1 // pred_check_branch
      %101 = sbr.rel (0) target = $region53
    $region52: #{tpu_custom_call.1} parent=1 // pred_region
      %102 = dma.done [#allocation12], 16384
    $region53: #{tpu_custom_call.1} parent=1 // pred_fallthru
      _
    %v104 = vld [vmem:[#allocation2] sm:$0xf]
    %v105 = vld [vmem:[#allocation5] sm:$0xff]
    %v106 = vld [vmem:[#allocation5 + $0x8] sm:$0xff]
    %v107 = vld [vmem:[#allocation5 + $0x10] sm:$0xff]
    %v108 = vld [vmem:[#allocation5 + $0x18] sm:$0xff]
    %v109 = vld [vmem:[#allocation5 + $0x20] sm:$0xff]
    %v110 = vld [vmem:[#allocation5 + $0x28] sm:$0xff]
    %v111 = vld [vmem:[#allocation5 + $0x30] sm:$0xff]
    %v112 = vld [vmem:[#allocation5 + $0x38] sm:$0xff]
    %v113 = vld [vmem:[#allocation7] sm:$0xf]
    %v115 = vlaneseq
    %v116 = vshrl.u32 %v115, 7
    %v117 = vsub.s32 0, %v116
    %v118 = vrot.slane %v113, %v117
    %v119 = vlaneseq
    %v120 = vshrl.u32 %v119, 7
    %v121 = vsub.s32 1, %v120
    %v122 = vrot.slane %v113, %v121
    %v123 = vlaneseq
    %v124 = vshrl.u32 %v123, 7
    %v125 = vsub.s32 2, %v124
    %v126 = vrot.slane %v113, %v125
    %v127 = vlaneseq
    %v128 = vshrl.u32 %v127, 7
    %v129 = vsub.s32 3, %v128
    %v130 = vrot.slane %v113, %v129
    %v143 = vunpack.c.l.b16 %v105
    %v144 = vunpack.c.h.b16 %v105
    %v145 = vunpack.c.l.b16 %v106
    %v146 = vunpack.c.h.b16 %v106
    %v147 = vunpack.c.l.b16 %v107
    %v148 = vunpack.c.h.b16 %v107
    %v149 = vunpack.c.l.b16 %v108
    %v150 = vunpack.c.h.b16 %v108
    %v151 = vunpack.c.l.b16 %v109
    %v152 = vunpack.c.h.b16 %v109
    %v153 = vunpack.c.l.b16 %v110
    %v154 = vunpack.c.h.b16 %v110
    %v155 = vunpack.c.l.b16 %v111
    %v156 = vunpack.c.h.b16 %v111
    %v157 = vunpack.c.l.b16 %v112
    %v158 = vunpack.c.h.b16 %v112
    %v159 = vpack.c.b16 %v147, %v143
    %v160 = vpack.c.b16 %v148, %v144
    %v161 = vpack.c.b16 %v149, %v145
    %v162 = vpack.c.b16 %v150, %v146
    %v163 = vpack.c.b16 %v155, %v151
    %v164 = vpack.c.b16 %v156, %v152
    %v165 = vpack.c.b16 %v157, %v153
    %v166 = vpack.c.b16 %v158, %v154
    %vm175 = vcmask 261120
    %v177 = vsel %vm175, %v104, 0
    %179 = vmatprep.subr.bf16.mxu0 0
    %180 = vmatpush1.bf16.msra.mxu0 0
    %181 = vmatprep.subr.bf16.mxu0 0
    %182 = vmatpush1.bf16.msra.mxu0 0
    %183 = vmatprep.subr.bf16.mxu0 0
    %184 = vmatpush1.bf16.msra.mxu0 0
    %185 = vmatprep.subr.bf16.mxu0 0
    %186 = vmatpush1.bf16.msra.mxu0 0
    %187 = vmatprep.subr.bf16.mxu0 0
    %188 = vmatpush1.bf16.msra.mxu0 0
    %189 = vmatprep.subr.bf16.mxu0 0
    %190 = vmatpush1.bf16.msra.mxu0 0
    %191 = vmatprep.subr.bf16.mxu0 %v164
    %192 = vmatpush1.bf16.msra.mxu0 %v163
    %193 = vmatprep.subr.bf16.mxu0 %v160
    %194 = vmatpush1.bf16.msra.mxu0 %v159
    %195 = vmatprep.subr.bf16.mxu0 0
    %196 = vmatpush2.bf16.msra.mxu0 0
    %197 = vmatprep.subr.bf16.mxu0 0
    %198 = vmatpush2.bf16.msra.mxu0 0
    %199 = vmatprep.subr.bf16.mxu0 0
    %200 = vmatpush2.bf16.msra.mxu0 0
    %201 = vmatprep.subr.bf16.mxu0 0
    %202 = vmatpush2.bf16.msra.mxu0 0
    %203 = vmatprep.subr.bf16.mxu0 0
    %204 = vmatpush2.bf16.msra.mxu0 0
    %205 = vmatprep.subr.bf16.mxu0 0
    %206 = vmatpush2.bf16.msra.mxu0 0
    %207 = vmatprep.subr.bf16.mxu0 0
    %208 = vmatpush2.bf16.msra.mxu0 0
    %209 = vmatprep.subr.bf16.mxu0 0
    %210 = vmatpush2.bf16.msra.mxu0 0
    %211 = vmatprep.mubr.bf16.mxu0 0
    %212 = vmatmul.mubr.bf16.gmra.mxu0 %v177
    %v213 = vpop.f32.mrf.mxu0
    %v214 = vadd.f32 %v118, %v213
    %v215 = vpop.f32.mrf.mxu0
    %v216 = vadd.f32 %v122, %v215
    %v217 = vpop.f32.mrf.mxu0
    %v218 = vpop.f32.mrf.mxu0
    %219 = vdwg.mxu0
    %220 = vmatprep.subr.bf16.mxu0 0
    %221 = vmatpush1.bf16.msra.mxu0 0
    %222 = vmatprep.subr.bf16.mxu0 0
    %223 = vmatpush1.bf16.msra.mxu0 0
    %224 = vmatprep.subr.bf16.mxu0 0
    %225 = vmatpush1.bf16.msra.mxu0 0
    %226 = vmatprep.subr.bf16.mxu0 0
    %227 = vmatpush1.bf16.msra.mxu0 0
    %228 = vmatprep.subr.bf16.mxu0 0
    %229 = vmatpush1.bf16.msra.mxu0 0
    %230 = vmatprep.subr.bf16.mxu0 0
    %231 = vmatpush1.bf16.msra.mxu0 0
    %232 = vmatprep.subr.bf16.mxu0 %v166
    %233 = vmatpush1.bf16.msra.mxu0 %v165
    %234 = vmatprep.subr.bf16.mxu0 %v162
    %235 = vmatpush1.bf16.msra.mxu0 %v161
    %236 = vmatprep.subr.bf16.mxu0 0
    %237 = vmatpush2.bf16.msra.mxu0 0
    %238 = vmatprep.subr.bf16.mxu0 0
    %239 = vmatpush2.bf16.msra.mxu0 0
    %240 = vmatprep.subr.bf16.mxu0 0
    %241 = vmatpush2.bf16.msra.mxu0 0
    %242 = vmatprep.subr.bf16.mxu0 0
    %243 = vmatpush2.bf16.msra.mxu0 0
    %244 = vmatprep.subr.bf16.mxu0 0
    %245 = vmatpush2.bf16.msra.mxu0 0
    %246 = vmatprep.subr.bf16.mxu0 0
    %247 = vmatpush2.bf16.msra.mxu0 0
    %248 = vmatprep.subr.bf16.mxu0 0
    %249 = vmatpush2.bf16.msra.mxu0 0
    %250 = vmatprep.subr.bf16.mxu0 0
    %251 = vmatpush2.bf16.msra.mxu0 0
    %252 = vmatprep.mubr.bf16.mxu0 0
    %253 = vmatmul.mubr.bf16.gmra.mxu0 %v177
    %v254 = vpop.f32.mrf.mxu0
    %v255 = vadd.f32 %v126, %v254
    %v256 = vpop.f32.mrf.mxu0
    %v257 = vadd.f32 %v130, %v256
    %v258 = vpop.f32.mrf.mxu0
    %v259 = vpop.f32.mrf.mxu0
    %260 = vdwg.mxu0
    %v261 = vmax.f32 %v214, 0.0
    %v262 = vmax.f32 %v216, 0.0
    %v263 = vmax.f32 %v255, 0.0
    %v264 = vmax.f32 %v257, 0.0
    %v265 = vpack.c.bf16 %v261, %v261
    %v266 = vpack.c.bf16 %v262, %v262
    %v267 = vpack.c.bf16 %v263, %v263
    %v268 = vpack.c.bf16 %v264, %v264
    %v269 = vld [vmem:[#allocation8] sm:$0xff]
    %v270 = vld [vmem:[#allocation8 + $0x8] sm:$0xff]
    %v271 = vld [vmem:[#allocation8 + $0x10] sm:$0xff]
    %v272 = vld [vmem:[#allocation8 + $0x18] sm:$0xff]
    %v273 = vld [vmem:[#allocation8 + $0x20] sm:$0xff]
    %v274 = vld [vmem:[#allocation8 + $0x28] sm:$0xff]
    %v275 = vld [vmem:[#allocation8 + $0x30] sm:$0xff]
    %v276 = vld [vmem:[#allocation8 + $0x38] sm:$0xff]
    %v277 = vld [vmem:[#allocation8 + $0x40] sm:$0xff]
    %v278 = vld [vmem:[#allocation8 + $0x48] sm:$0xff]
    %v279 = vld [vmem:[#allocation8 + $0x50] sm:$0xff]
    %v280 = vld [vmem:[#allocation8 + $0x58] sm:$0xff]
    %v281 = vld [vmem:[#allocation8 + $0x60] sm:$0xff]
    %v282 = vld [vmem:[#allocation8 + $0x68] sm:$0xff]
    %v283 = vld [vmem:[#allocation8 + $0x70] sm:$0xff]
    %v284 = vld [vmem:[#allocation8 + $0x78] sm:$0xff]
    %v285 = vld [vmem:[#allocation8 + $0x80] sm:$0xff]
    %v286 = vld [vmem:[#allocation8 + $0x88] sm:$0xff]
    %v287 = vld [vmem:[#allocation8 + $0x90] sm:$0xff]
    %v288 = vld [vmem:[#allocation8 + $0x98] sm:$0xff]
    %v289 = vld [vmem:[#allocation8 + $0xa0] sm:$0xff]
    %v290 = vld [vmem:[#allocation8 + $0xa8] sm:$0xff]
    %v291 = vld [vmem:[#allocation8 + $0xb0] sm:$0xff]
    %v292 = vld [vmem:[#allocation8 + $0xb8] sm:$0xff]
    %v293 = vld [vmem:[#allocation8 + $0xc0] sm:$0xff]
    %v294 = vld [vmem:[#allocation8 + $0xc8] sm:$0xff]
    %v295 = vld [vmem:[#allocation8 + $0xd0] sm:$0xff]
    %v296 = vld [vmem:[#allocation8 + $0xd8] sm:$0xff]
    %v297 = vld [vmem:[#allocation8 + $0xe0] sm:$0xff]
    %v298 = vld [vmem:[#allocation8 + $0xe8] sm:$0xff]
    %v299 = vld [vmem:[#allocation8 + $0xf0] sm:$0xff]
    %v300 = vld [vmem:[#allocation8 + $0xf8] sm:$0xff]
    %v301 = vld [vmem:[#allocation8 + $0x100] sm:$0xff]
    %v302 = vld [vmem:[#allocation8 + $0x108] sm:$0xff]
    %v303 = vld [vmem:[#allocation8 + $0x110] sm:$0xff]
    %v304 = vld [vmem:[#allocation8 + $0x118] sm:$0xff]
    %v305 = vld [vmem:[#allocation8 + $0x120] sm:$0xff]
    %v306 = vld [vmem:[#allocation8 + $0x128] sm:$0xff]
    %v307 = vld [vmem:[#allocation8 + $0x130] sm:$0xff]
    %v308 = vld [vmem:[#allocation8 + $0x138] sm:$0xff]
    %v309 = vld [vmem:[#allocation8 + $0x140] sm:$0xff]
    %v310 = vld [vmem:[#allocation8 + $0x148] sm:$0xff]
    %v311 = vld [vmem:[#allocation8 + $0x150] sm:$0xff]
    %v312 = vld [vmem:[#allocation8 + $0x158] sm:$0xff]
    %v313 = vld [vmem:[#allocation8 + $0x160] sm:$0xff]
    %v314 = vld [vmem:[#allocation8 + $0x168] sm:$0xff]
    %v315 = vld [vmem:[#allocation8 + $0x170] sm:$0xff]
    %v316 = vld [vmem:[#allocation8 + $0x178] sm:$0xff]
    %v317 = vld [vmem:[#allocation8 + $0x180] sm:$0xff]
    %v318 = vld [vmem:[#allocation8 + $0x188] sm:$0xff]
    %v319 = vld [vmem:[#allocation8 + $0x190] sm:$0xff]
    %v320 = vld [vmem:[#allocation8 + $0x198] sm:$0xff]
    %v321 = vld [vmem:[#allocation8 + $0x1a0] sm:$0xff]
    %v322 = vld [vmem:[#allocation8 + $0x1a8] sm:$0xff]
    %v323 = vld [vmem:[#allocation8 + $0x1b0] sm:$0xff]
    %v324 = vld [vmem:[#allocation8 + $0x1b8] sm:$0xff]
    %v325 = vld [vmem:[#allocation8 + $0x1c0] sm:$0xff]
    %v326 = vld [vmem:[#allocation8 + $0x1c8] sm:$0xff]
    %v327 = vld [vmem:[#allocation8 + $0x1d0] sm:$0xff]
    %v328 = vld [vmem:[#allocation8 + $0x1d8] sm:$0xff]
    %v329 = vld [vmem:[#allocation8 + $0x1e0] sm:$0xff]
    %v330 = vld [vmem:[#allocation8 + $0x1e8] sm:$0xff]
    %v331 = vld [vmem:[#allocation8 + $0x1f0] sm:$0xff]
    %v332 = vld [vmem:[#allocation8 + $0x1f8] sm:$0xff]
    %v333 = vld [vmem:[#allocation8 + $0x200] sm:$0xff]
    %v334 = vld [vmem:[#allocation8 + $0x208] sm:$0xff]
    %v335 = vld [vmem:[#allocation8 + $0x210] sm:$0xff]
    %v336 = vld [vmem:[#allocation8 + $0x218] sm:$0xff]
    %v337 = vld [vmem:[#allocation8 + $0x220] sm:$0xff]
    %v338 = vld [vmem:[#allocation8 + $0x228] sm:$0xff]
    %v339 = vld [vmem:[#allocation8 + $0x230] sm:$0xff]
    %v340 = vld [vmem:[#allocation8 + $0x238] sm:$0xff]
    %v341 = vld [vmem:[#allocation8 + $0x240] sm:$0xff]
    %v342 = vld [vmem:[#allocation8 + $0x248] sm:$0xff]
    %v343 = vld [vmem:[#allocation8 + $0x250] sm:$0xff]
    %v344 = vld [vmem:[#allocation8 + $0x258] sm:$0xff]
    %v345 = vld [vmem:[#allocation8 + $0x260] sm:$0xff]
    %v346 = vld [vmem:[#allocation8 + $0x268] sm:$0xff]
    %v347 = vld [vmem:[#allocation8 + $0x270] sm:$0xff]
    %v348 = vld [vmem:[#allocation8 + $0x278] sm:$0xff]
    %v349 = vld [vmem:[#allocation8 + $0x280] sm:$0xff]
    %v350 = vld [vmem:[#allocation8 + $0x288] sm:$0xff]
    %v351 = vld [vmem:[#allocation8 + $0x290] sm:$0xff]
    %v352 = vld [vmem:[#allocation8 + $0x298] sm:$0xff]
    %v353 = vld [vmem:[#allocation8 + $0x2a0] sm:$0xff]
    %v354 = vld [vmem:[#allocation8 + $0x2a8] sm:$0xff]
    %v355 = vld [vmem:[#allocation8 + $0x2b0] sm:$0xff]
    %v356 = vld [vmem:[#allocation8 + $0x2b8] sm:$0xff]
    %v357 = vld [vmem:[#allocation8 + $0x2c0] sm:$0xff]
    %v358 = vld [vmem:[#allocation8 + $0x2c8] sm:$0xff]
    %v359 = vld [vmem:[#allocation8 + $0x2d0] sm:$0xff]
    %v360 = vld [vmem:[#allocation8 + $0x2d8] sm:$0xff]
    %v361 = vld [vmem:[#allocation8 + $0x2e0] sm:$0xff]
    %v362 = vld [vmem:[#allocation8 + $0x2e8] sm:$0xff]
    %v363 = vld [vmem:[#allocation8 + $0x2f0] sm:$0xff]
    %v364 = vld [vmem:[#allocation8 + $0x2f8] sm:$0xff]
    %v365 = vld [vmem:[#allocation8 + $0x300] sm:$0xff]
    %v366 = vld [vmem:[#allocation8 + $0x308] sm:$0xff]
    %v367 = vld [vmem:[#allocation8 + $0x310] sm:$0xff]
    %v368 = vld [vmem:[#allocation8 + $0x318] sm:$0xff]
    %v369 = vld [vmem:[#allocation8 + $0x320] sm:$0xff]
    %v370 = vld [vmem:[#allocation8 + $0x328] sm:$0xff]
    %v371 = vld [vmem:[#allocation8 + $0x330] sm:$0xff]
    %v372 = vld [vmem:[#allocation8 + $0x338] sm:$0xff]
    %v373 = vld [vmem:[#allocation8 + $0x340] sm:$0xff]
    %v374 = vld [vmem:[#allocation8 + $0x348] sm:$0xff]
    %v375 = vld [vmem:[#allocation8 + $0x350] sm:$0xff]
    %v376 = vld [vmem:[#allocation8 + $0x358] sm:$0xff]
    %v377 = vld [vmem:[#allocation8 + $0x360] sm:$0xff]
    %v378 = vld [vmem:[#allocation8 + $0x368] sm:$0xff]
    %v379 = vld [vmem:[#allocation8 + $0x370] sm:$0xff]
    %v380 = vld [vmem:[#allocation8 + $0x378] sm:$0xff]
    %v381 = vld [vmem:[#allocation8 + $0x380] sm:$0xff]
    %v382 = vld [vmem:[#allocation8 + $0x388] sm:$0xff]
    %v383 = vld [vmem:[#allocation8 + $0x390] sm:$0xff]
    %v384 = vld [vmem:[#allocation8 + $0x398] sm:$0xff]
    %v385 = vld [vmem:[#allocation8 + $0x3a0] sm:$0xff]
    %v386 = vld [vmem:[#allocation8 + $0x3a8] sm:$0xff]
    %v387 = vld [vmem:[#allocation8 + $0x3b0] sm:$0xff]
    %v388 = vld [vmem:[#allocation8 + $0x3b8] sm:$0xff]
    %v389 = vld [vmem:[#allocation8 + $0x3c0] sm:$0xff]
    %v390 = vld [vmem:[#allocation8 + $0x3c8] sm:$0xff]
    %v391 = vld [vmem:[#allocation8 + $0x3d0] sm:$0xff]
    %v392 = vld [vmem:[#allocation8 + $0x3d8] sm:$0xff]
    %v393 = vld [vmem:[#allocation8 + $0x3e0] sm:$0xff]
    %v394 = vld [vmem:[#allocation8 + $0x3e8] sm:$0xff]
    %v395 = vld [vmem:[#allocation8 + $0x3f0] sm:$0xff]
    %v396 = vld [vmem:[#allocation8 + $0x3f8] sm:$0xff]
    %v397 = vld [vmem:[#allocation8 + $0x400] sm:$0xff]
    %v398 = vld [vmem:[#allocation8 + $0x408] sm:$0xff]
    %v399 = vld [vmem:[#allocation8 + $0x410] sm:$0xff]
    %v400 = vld [vmem:[#allocation8 + $0x418] sm:$0xff]
    %v401 = vld [vmem:[#allocation8 + $0x420] sm:$0xff]
    %v402 = vld [vmem:[#allocation8 + $0x428] sm:$0xff]
    %v403 = vld [vmem:[#allocation8 + $0x430] sm:$0xff]
    %v404 = vld [vmem:[#allocation8 + $0x438] sm:$0xff]
    %v405 = vld [vmem:[#allocation8 + $0x440] sm:$0xff]
    %v406 = vld [vmem:[#allocation8 + $0x448] sm:$0xff]
    %v407 = vld [vmem:[#allocation8 + $0x450] sm:$0xff]
    %v408 = vld [vmem:[#allocation8 + $0x458] sm:$0xff]
    %v409 = vld [vmem:[#allocation8 + $0x460] sm:$0xff]
    %v410 = vld [vmem:[#allocation8 + $0x468] sm:$0xff]
    %v411 = vld [vmem:[#allocation8 + $0x470] sm:$0xff]
    %v412 = vld [vmem:[#allocation8 + $0x478] sm:$0xff]
    %v413 = vld [vmem:[#allocation8 + $0x480] sm:$0xff]
    %v414 = vld [vmem:[#allocation8 + $0x488] sm:$0xff]
    %v415 = vld [vmem:[#allocation8 + $0x490] sm:$0xff]
    %v416 = vld [vmem:[#allocation8 + $0x498] sm:$0xff]
    %v417 = vld [vmem:[#allocation8 + $0x4a0] sm:$0xff]
    %v418 = vld [vmem:[#allocation8 + $0x4a8] sm:$0xff]
    %v419 = vld [vmem:[#allocation8 + $0x4b0] sm:$0xff]
    %v420 = vld [vmem:[#allocation8 + $0x4b8] sm:$0xff]
    %v421 = vld [vmem:[#allocation8 + $0x4c0] sm:$0xff]
    %v422 = vld [vmem:[#allocation8 + $0x4c8] sm:$0xff]
    %v423 = vld [vmem:[#allocation8 + $0x4d0] sm:$0xff]
    %v424 = vld [vmem:[#allocation8 + $0x4d8] sm:$0xff]
    %v425 = vld [vmem:[#allocation8 + $0x4e0] sm:$0xff]
    %v426 = vld [vmem:[#allocation8 + $0x4e8] sm:$0xff]
    %v427 = vld [vmem:[#allocation8 + $0x4f0] sm:$0xff]
    %v428 = vld [vmem:[#allocation8 + $0x4f8] sm:$0xff]
    %v429 = vld [vmem:[#allocation8 + $0x500] sm:$0xff]
    %v430 = vld [vmem:[#allocation8 + $0x508] sm:$0xff]
    %v431 = vld [vmem:[#allocation8 + $0x510] sm:$0xff]
    %v432 = vld [vmem:[#allocation8 + $0x518] sm:$0xff]
    %v433 = vld [vmem:[#allocation8 + $0x520] sm:$0xff]
    %v434 = vld [vmem:[#allocation8 + $0x528] sm:$0xff]
    %v435 = vld [vmem:[#allocation8 + $0x530] sm:$0xff]
    %v436 = vld [vmem:[#allocation8 + $0x538] sm:$0xff]
    %v437 = vld [vmem:[#allocation8 + $0x540] sm:$0xff]
    %v438 = vld [vmem:[#allocation8 + $0x548] sm:$0xff]
    %v439 = vld [vmem:[#allocation8 + $0x550] sm:$0xff]
    %v440 = vld [vmem:[#allocation8 + $0x558] sm:$0xff]
    %v441 = vld [vmem:[#allocation8 + $0x560] sm:$0xff]
    %v442 = vld [vmem:[#allocation8 + $0x568] sm:$0xff]
    %v443 = vld [vmem:[#allocation8 + $0x570] sm:$0xff]
    %v444 = vld [vmem:[#allocation8 + $0x578] sm:$0xff]
    %v445 = vld [vmem:[#allocation8 + $0x580] sm:$0xff]
    %v446 = vld [vmem:[#allocation8 + $0x588] sm:$0xff]
    %v447 = vld [vmem:[#allocation8 + $0x590] sm:$0xff]
    %v448 = vld [vmem:[#allocation8 + $0x598] sm:$0xff]
    %v449 = vld [vmem:[#allocation8 + $0x5a0] sm:$0xff]
    %v450 = vld [vmem:[#allocation8 + $0x5a8] sm:$0xff]
    %v451 = vld [vmem:[#allocation8 + $0x5b0] sm:$0xff]
    %v452 = vld [vmem:[#allocation8 + $0x5b8] sm:$0xff]
    %v453 = vld [vmem:[#allocation8 + $0x5c0] sm:$0xff]
    %v454 = vld [vmem:[#allocation8 + $0x5c8] sm:$0xff]
    %v455 = vld [vmem:[#allocation8 + $0x5d0] sm:$0xff]
    %v456 = vld [vmem:[#allocation8 + $0x5d8] sm:$0xff]
    %v457 = vld [vmem:[#allocation8 + $0x5e0] sm:$0xff]
    %v458 = vld [vmem:[#allocation8 + $0x5e8] sm:$0xff]
    %v459 = vld [vmem:[#allocation8 + $0x5f0] sm:$0xff]
    %v460 = vld [vmem:[#allocation8 + $0x5f8] sm:$0xff]
    %v461 = vld [vmem:[#allocation8 + $0x600] sm:$0xff]
    %v462 = vld [vmem:[#allocation8 + $0x608] sm:$0xff]
    %v463 = vld [vmem:[#allocation8 + $0x610] sm:$0xff]
    %v464 = vld [vmem:[#allocation8 + $0x618] sm:$0xff]
    %v465 = vld [vmem:[#allocation8 + $0x620] sm:$0xff]
    %v466 = vld [vmem:[#allocation8 + $0x628] sm:$0xff]
    %v467 = vld [vmem:[#allocation8 + $0x630] sm:$0xff]
    %v468 = vld [vmem:[#allocation8 + $0x638] sm:$0xff]
    %v469 = vld [vmem:[#allocation8 + $0x640] sm:$0xff]
    %v470 = vld [vmem:[#allocation8 + $0x648] sm:$0xff]
    %v471 = vld [vmem:[#allocation8 + $0x650] sm:$0xff]
    %v472 = vld [vmem:[#allocation8 + $0x658] sm:$0xff]
    %v473 = vld [vmem:[#allocation8 + $0x660] sm:$0xff]
    %v474 = vld [vmem:[#allocation8 + $0x668] sm:$0xff]
    %v475 = vld [vmem:[#allocation8 + $0x670] sm:$0xff]
    %v476 = vld [vmem:[#allocation8 + $0x678] sm:$0xff]
    %v477 = vld [vmem:[#allocation8 + $0x680] sm:$0xff]
    %v478 = vld [vmem:[#allocation8 + $0x688] sm:$0xff]
    %v479 = vld [vmem:[#allocation8 + $0x690] sm:$0xff]
    %v480 = vld [vmem:[#allocation8 + $0x698] sm:$0xff]
    %v481 = vld [vmem:[#allocation8 + $0x6a0] sm:$0xff]
    %v482 = vld [vmem:[#allocation8 + $0x6a8] sm:$0xff]
    %v483 = vld [vmem:[#allocation8 + $0x6b0] sm:$0xff]
    %v484 = vld [vmem:[#allocation8 + $0x6b8] sm:$0xff]
    %v485 = vld [vmem:[#allocation8 + $0x6c0] sm:$0xff]
    %v486 = vld [vmem:[#allocation8 + $0x6c8] sm:$0xff]
    %v487 = vld [vmem:[#allocation8 + $0x6d0] sm:$0xff]
    %v488 = vld [vmem:[#allocation8 + $0x6d8] sm:$0xff]
    %v489 = vld [vmem:[#allocation8 + $0x6e0] sm:$0xff]
    %v490 = vld [vmem:[#allocation8 + $0x6e8] sm:$0xff]
    %v491 = vld [vmem:[#allocation8 + $0x6f0] sm:$0xff]
    %v492 = vld [vmem:[#allocation8 + $0x6f8] sm:$0xff]
    %v493 = vld [vmem:[#allocation8 + $0x700] sm:$0xff]
    %v494 = vld [vmem:[#allocation8 + $0x708] sm:$0xff]
    %v495 = vld [vmem:[#allocation8 + $0x710] sm:$0xff]
    %v496 = vld [vmem:[#allocation8 + $0x718] sm:$0xff]
    %v497 = vld [vmem:[#allocation8 + $0x720] sm:$0xff]
    %v498 = vld [vmem:[#allocation8 + $0x728] sm:$0xff]
    %v499 = vld [vmem:[#allocation8 + $0x730] sm:$0xff]
    %v500 = vld [vmem:[#allocation8 + $0x738] sm:$0xff]
    %v501 = vld [vmem:[#allocation8 + $0x740] sm:$0xff]
    %v502 = vld [vmem:[#allocation8 + $0x748] sm:$0xff]
    %v503 = vld [vmem:[#allocation8 + $0x750] sm:$0xff]
    %v504 = vld [vmem:[#allocation8 + $0x758] sm:$0xff]
    %v505 = vld [vmem:[#allocation8 + $0x760] sm:$0xff]
    %v506 = vld [vmem:[#allocation8 + $0x768] sm:$0xff]
    %v507 = vld [vmem:[#allocation8 + $0x770] sm:$0xff]
    %v508 = vld [vmem:[#allocation8 + $0x778] sm:$0xff]
    %v509 = vld [vmem:[#allocation8 + $0x780] sm:$0xff]
    %v510 = vld [vmem:[#allocation8 + $0x788] sm:$0xff]
    %v511 = vld [vmem:[#allocation8 + $0x790] sm:$0xff]
    %v512 = vld [vmem:[#allocation8 + $0x798] sm:$0xff]
    %v513 = vld [vmem:[#allocation8 + $0x7a0] sm:$0xff]
    %v514 = vld [vmem:[#allocation8 + $0x7a8] sm:$0xff]
    %v515 = vld [vmem:[#allocation8 + $0x7b0] sm:$0xff]
    %v516 = vld [vmem:[#allocation8 + $0x7b8] sm:$0xff]
    %v517 = vld [vmem:[#allocation8 + $0x7c0] sm:$0xff]
    %v518 = vld [vmem:[#allocation8 + $0x7c8] sm:$0xff]
    %v519 = vld [vmem:[#allocation8 + $0x7d0] sm:$0xff]
    %v520 = vld [vmem:[#allocation8 + $0x7d8] sm:$0xff]
    %v521 = vld [vmem:[#allocation8 + $0x7e0] sm:$0xff]
    %v522 = vld [vmem:[#allocation8 + $0x7e8] sm:$0xff]
    %v523 = vld [vmem:[#allocation8 + $0x7f0] sm:$0xff]
    %v524 = vld [vmem:[#allocation8 + $0x7f8] sm:$0xff]
    %v525 = vld [vmem:[#allocation10] sm:$0xff]
    %v527 = vlaneseq
    %v528 = vshrl.u32 %v527, 7
    %v529 = vsub.s32 0, %v528
    %v530 = vrot.slane %v525, %v529
    %v531 = vlaneseq
    %v532 = vshrl.u32 %v531, 7
    %v533 = vsub.s32 1, %v532
    %v534 = vrot.slane %v525, %v533
    %v535 = vlaneseq
    %v536 = vshrl.u32 %v535, 7
    %v537 = vsub.s32 2, %v536
    %v538 = vrot.slane %v525, %v537
    %v539 = vlaneseq
    %v540 = vshrl.u32 %v539, 7
    %v541 = vsub.s32 3, %v540
    %v542 = vrot.slane %v525, %v541
    %v543 = vlaneseq
    %v544 = vshrl.u32 %v543, 7
    %v545 = vsub.s32 4, %v544
    %v546 = vrot.slane %v525, %v545
    %v547 = vlaneseq
    %v548 = vshrl.u32 %v547, 7
    %v549 = vsub.s32 5, %v548
    %v550 = vrot.slane %v525, %v549
    %v551 = vlaneseq
    %v552 = vshrl.u32 %v551, 7
    %v553 = vsub.s32 6, %v552
    %v554 = vrot.slane %v525, %v553
    %v555 = vlaneseq
    %v556 = vshrl.u32 %v555, 7
    %v557 = vsub.s32 7, %v556
    %v558 = vrot.slane %v525, %v557
    %v823 = vunpack.c.l.b16 %v269
    %v824 = vunpack.c.h.b16 %v269
    %v825 = vunpack.c.l.b16 %v270
    %v826 = vunpack.c.h.b16 %v270
    %v827 = vunpack.c.l.b16 %v271
    %v828 = vunpack.c.h.b16 %v271
    %v829 = vunpack.c.l.b16 %v272
    %v830 = vunpack.c.h.b16 %v272
    %v831 = vunpack.c.l.b16 %v273
    %v832 = vunpack.c.h.b16 %v273
    %v833 = vunpack.c.l.b16 %v274
    %v834 = vunpack.c.h.b16 %v274
    %v835 = vunpack.c.l.b16 %v275
    %v836 = vunpack.c.h.b16 %v275
    %v837 = vunpack.c.l.b16 %v276
    %v838 = vunpack.c.h.b16 %v276
    %v839 = vunpack.c.l.b16 %v277
    %v840 = vunpack.c.h.b16 %v277
    %v841 = vunpack.c.l.b16 %v278
    %v842 = vunpack.c.h.b16 %v278
    %v843 = vunpack.c.l.b16 %v279
    %v844 = vunpack.c.h.b16 %v279
    %v845 = vunpack.c.l.b16 %v280
    %v846 = vunpack.c.h.b16 %v280
    %v847 = vunpack.c.l.b16 %v281
    %v848 = vunpack.c.h.b16 %v281
    %v849 = vunpack.c.l.b16 %v282
    %v850 = vunpack.c.h.b16 %v282
    %v851 = vunpack.c.l.b16 %v283
    %v852 = vunpack.c.h.b16 %v283
    %v853 = vunpack.c.l.b16 %v284
    %v854 = vunpack.c.h.b16 %v284
    %v855 = vunpack.c.l.b16 %v285
    %v856 = vunpack.c.h.b16 %v285
    %v857 = vunpack.c.l.b16 %v286
    %v858 = vunpack.c.h.b16 %v286
    %v859 = vunpack.c.l.b16 %v287
    %v860 = vunpack.c.h.b16 %v287
    %v861 = vunpack.c.l.b16 %v288
    %v862 = vunpack.c.h.b16 %v288
    %v863 = vunpack.c.l.b16 %v289
    %v864 = vunpack.c.h.b16 %v289
    %v865 = vunpack.c.l.b16 %v290
    %v866 = vunpack.c.h.b16 %v290
    %v867 = vunpack.c.l.b16 %v291
    %v868 = vunpack.c.h.b16 %v291
    %v869 = vunpack.c.l.b16 %v292
    %v870 = vunpack.c.h.b16 %v292
    %v871 = vunpack.c.l.b16 %v293
    %v872 = vunpack.c.h.b16 %v293
    %v873 = vunpack.c.l.b16 %v294
    %v874 = vunpack.c.h.b16 %v294
    %v875 = vunpack.c.l.b16 %v295
    %v876 = vunpack.c.h.b16 %v295
    %v877 = vunpack.c.l.b16 %v296
    %v878 = vunpack.c.h.b16 %v296
    %v879 = vunpack.c.l.b16 %v297
    %v880 = vunpack.c.h.b16 %v297
    %v881 = vunpack.c.l.b16 %v298
    %v882 = vunpack.c.h.b16 %v298
    %v883 = vunpack.c.l.b16 %v299
    %v884 = vunpack.c.h.b16 %v299
    %v885 = vunpack.c.l.b16 %v300
    %v886 = vunpack.c.h.b16 %v300
    %v887 = vunpack.c.l.b16 %v301
    %v888 = vunpack.c.h.b16 %v301
    %v889 = vunpack.c.l.b16 %v302
    %v890 = vunpack.c.h.b16 %v302
    %v891 = vunpack.c.l.b16 %v303
    %v892 = vunpack.c.h.b16 %v303
    %v893 = vunpack.c.l.b16 %v304
    %v894 = vunpack.c.h.b16 %v304
    %v895 = vunpack.c.l.b16 %v305
    %v896 = vunpack.c.h.b16 %v305
    %v897 = vunpack.c.l.b16 %v306
    %v898 = vunpack.c.h.b16 %v306
    %v899 = vunpack.c.l.b16 %v307
    %v900 = vunpack.c.h.b16 %v307
    %v901 = vunpack.c.l.b16 %v308
    %v902 = vunpack.c.h.b16 %v308
    %v903 = vunpack.c.l.b16 %v309
    %v904 = vunpack.c.h.b16 %v309
    %v905 = vunpack.c.l.b16 %v310
    %v906 = vunpack.c.h.b16 %v310
    %v907 = vunpack.c.l.b16 %v311
    %v908 = vunpack.c.h.b16 %v311
    %v909 = vunpack.c.l.b16 %v312
    %v910 = vunpack.c.h.b16 %v312
    %v911 = vunpack.c.l.b16 %v313
    %v912 = vunpack.c.h.b16 %v313
    %v913 = vunpack.c.l.b16 %v314
    %v914 = vunpack.c.h.b16 %v314
    %v915 = vunpack.c.l.b16 %v315
    %v916 = vunpack.c.h.b16 %v315
    %v917 = vunpack.c.l.b16 %v316
    %v918 = vunpack.c.h.b16 %v316
    %v919 = vunpack.c.l.b16 %v317
    %v920 = vunpack.c.h.b16 %v317
    %v921 = vunpack.c.l.b16 %v318
    %v922 = vunpack.c.h.b16 %v318
    %v923 = vunpack.c.l.b16 %v319
    %v924 = vunpack.c.h.b16 %v319
    %v925 = vunpack.c.l.b16 %v320
    %v926 = vunpack.c.h.b16 %v320
    %v927 = vunpack.c.l.b16 %v321
    %v928 = vunpack.c.h.b16 %v321
    %v929 = vunpack.c.l.b16 %v322
    %v930 = vunpack.c.h.b16 %v322
    %v931 = vunpack.c.l.b16 %v323
    %v932 = vunpack.c.h.b16 %v323
    %v933 = vunpack.c.l.b16 %v324
    %v934 = vunpack.c.h.b16 %v324
    %v935 = vunpack.c.l.b16 %v325
    %v936 = vunpack.c.h.b16 %v325
    %v937 = vunpack.c.l.b16 %v326
    %v938 = vunpack.c.h.b16 %v326
    %v939 = vunpack.c.l.b16 %v327
    %v940 = vunpack.c.h.b16 %v327
    %v941 = vunpack.c.l.b16 %v328
    %v942 = vunpack.c.h.b16 %v328
    %v943 = vunpack.c.l.b16 %v329
    %v944 = vunpack.c.h.b16 %v329
    %v945 = vunpack.c.l.b16 %v330
    %v946 = vunpack.c.h.b16 %v330
    %v947 = vunpack.c.l.b16 %v331
    %v948 = vunpack.c.h.b16 %v331
    %v949 = vunpack.c.l.b16 %v332
    %v950 = vunpack.c.h.b16 %v332
    %v951 = vunpack.c.l.b16 %v333
    %v952 = vunpack.c.h.b16 %v333
    %v953 = vunpack.c.l.b16 %v334
    %v954 = vunpack.c.h.b16 %v334
    %v955 = vunpack.c.l.b16 %v335
    %v956 = vunpack.c.h.b16 %v335
    %v957 = vunpack.c.l.b16 %v336
    %v958 = vunpack.c.h.b16 %v336
    %v959 = vunpack.c.l.b16 %v337
    %v960 = vunpack.c.h.b16 %v337
    %v961 = vunpack.c.l.b16 %v338
    %v962 = vunpack.c.h.b16 %v338
    %v963 = vunpack.c.l.b16 %v339
    %v964 = vunpack.c.h.b16 %v339
    %v965 = vunpack.c.l.b16 %v340
    %v966 = vunpack.c.h.b16 %v340
    %v967 = vunpack.c.l.b16 %v341
    %v968 = vunpack.c.h.b16 %v341
    %v969 = vunpack.c.l.b16 %v342
    %v970 = vunpack.c.h.b16 %v342
    %v971 = vunpack.c.l.b16 %v343
    %v972 = vunpack.c.h.b16 %v343
    %v973 = vunpack.c.l.b16 %v344
    %v974 = vunpack.c.h.b16 %v344
    %v975 = vunpack.c.l.b16 %v345
    %v976 = vunpack.c.h.b16 %v345
    %v977 = vunpack.c.l.b16 %v346
    %v978 = vunpack.c.h.b16 %v346
    %v979 = vunpack.c.l.b16 %v347
    %v980 = vunpack.c.h.b16 %v347
    %v981 = vunpack.c.l.b16 %v348
    %v982 = vunpack.c.h.b16 %v348
    %v983 = vunpack.c.l.b16 %v349
    %v984 = vunpack.c.h.b16 %v349
    %v985 = vunpack.c.l.b16 %v350
    %v986 = vunpack.c.h.b16 %v350
    %v987 = vunpack.c.l.b16 %v351
    %v988 = vunpack.c.h.b16 %v351
    %v989 = vunpack.c.l.b16 %v352
    %v990 = vunpack.c.h.b16 %v352
    %v991 = vunpack.c.l.b16 %v353
    %v992 = vunpack.c.h.b16 %v353
    %v993 = vunpack.c.l.b16 %v354
    %v994 = vunpack.c.h.b16 %v354
    %v995 = vunpack.c.l.b16 %v355
    %v996 = vunpack.c.h.b16 %v355
    %v997 = vunpack.c.l.b16 %v356
    %v998 = vunpack.c.h.b16 %v356
    %v999 = vunpack.c.l.b16 %v357
    %v1000 = vunpack.c.h.b16 %v357
    %v1001 = vunpack.c.l.b16 %v358
    %v1002 = vunpack.c.h.b16 %v358
    %v1003 = vunpack.c.l.b16 %v359
    %v1004 = vunpack.c.h.b16 %v359
    %v1005 = vunpack.c.l.b16 %v360
    %v1006 = vunpack.c.h.b16 %v360
    %v1007 = vunpack.c.l.b16 %v361
    %v1008 = vunpack.c.h.b16 %v361
    %v1009 = vunpack.c.l.b16 %v362
    %v1010 = vunpack.c.h.b16 %v362
    %v1011 = vunpack.c.l.b16 %v363
    %v1012 = vunpack.c.h.b16 %v363
    %v1013 = vunpack.c.l.b16 %v364
    %v1014 = vunpack.c.h.b16 %v364
    %v1015 = vunpack.c.l.b16 %v365
    %v1016 = vunpack.c.h.b16 %v365
    %v1017 = vunpack.c.l.b16 %v366
    %v1018 = vunpack.c.h.b16 %v366
    %v1019 = vunpack.c.l.b16 %v367
    %v1020 = vunpack.c.h.b16 %v367
    %v1021 = vunpack.c.l.b16 %v368
    %v1022 = vunpack.c.h.b16 %v368
    %v1023 = vunpack.c.l.b16 %v369
    %v1024 = vunpack.c.h.b16 %v369
    %v1025 = vunpack.c.l.b16 %v370
    %v1026 = vunpack.c.h.b16 %v370
    %v1027 = vunpack.c.l.b16 %v371
    %v1028 = vunpack.c.h.b16 %v371
    %v1029 = vunpack.c.l.b16 %v372
    %v1030 = vunpack.c.h.b16 %v372
    %v1031 = vunpack.c.l.b16 %v373
    %v1032 = vunpack.c.h.b16 %v373
    %v1033 = vunpack.c.l.b16 %v374
    %v1034 = vunpack.c.h.b16 %v374
    %v1035 = vunpack.c.l.b16 %v375
    %v1036 = vunpack.c.h.b16 %v375
    %v1037 = vunpack.c.l.b16 %v376
    %v1038 = vunpack.c.h.b16 %v376
    %v1039 = vunpack.c.l.b16 %v377
    %v1040 = vunpack.c.h.b16 %v377
    %v1041 = vunpack.c.l.b16 %v378
    %v1042 = vunpack.c.h.b16 %v378
    %v1043 = vunpack.c.l.b16 %v379
    %v1044 = vunpack.c.h.b16 %v379
    %v1045 = vunpack.c.l.b16 %v380
    %v1046 = vunpack.c.h.b16 %v380
    %v1047 = vunpack.c.l.b16 %v381
    %v1048 = vunpack.c.h.b16 %v381
    %v1049 = vunpack.c.l.b16 %v382
    %v1050 = vunpack.c.h.b16 %v382
    %v1051 = vunpack.c.l.b16 %v383
    %v1052 = vunpack.c.h.b16 %v383
    %v1053 = vunpack.c.l.b16 %v384
    %v1054 = vunpack.c.h.b16 %v384
    %v1055 = vunpack.c.l.b16 %v385
    %v1056 = vunpack.c.h.b16 %v385
    %v1057 = vunpack.c.l.b16 %v386
    %v1058 = vunpack.c.h.b16 %v386
    %v1059 = vunpack.c.l.b16 %v387
    %v1060 = vunpack.c.h.b16 %v387
    %v1061 = vunpack.c.l.b16 %v388
    %v1062 = vunpack.c.h.b16 %v388
    %v1063 = vunpack.c.l.b16 %v389
    %v1064 = vunpack.c.h.b16 %v389
    %v1065 = vunpack.c.l.b16 %v390
    %v1066 = vunpack.c.h.b16 %v390
    %v1067 = vunpack.c.l.b16 %v391
    %v1068 = vunpack.c.h.b16 %v391
    %v1069 = vunpack.c.l.b16 %v392
    %v1070 = vunpack.c.h.b16 %v392
    %v1071 = vunpack.c.l.b16 %v393
    %v1072 = vunpack.c.h.b16 %v393
    %v1073 = vunpack.c.l.b16 %v394
    %v1074 = vunpack.c.h.b16 %v394
    %v1075 = vunpack.c.l.b16 %v395
    %v1076 = vunpack.c.h.b16 %v395
    %v1077 = vunpack.c.l.b16 %v396
    %v1078 = vunpack.c.h.b16 %v396
    %v1079 = vunpack.c.l.b16 %v397
    %v1080 = vunpack.c.h.b16 %v397
    %v1081 = vunpack.c.l.b16 %v398
    %v1082 = vunpack.c.h.b16 %v398
    %v1083 = vunpack.c.l.b16 %v399
    %v1084 = vunpack.c.h.b16 %v399
    %v1085 = vunpack.c.l.b16 %v400
    %v1086 = vunpack.c.h.b16 %v400
    %v1087 = vunpack.c.l.b16 %v401
    %v1088 = vunpack.c.h.b16 %v401
    %v1089 = vunpack.c.l.b16 %v402
    %v1090 = vunpack.c.h.b16 %v402
    %v1091 = vunpack.c.l.b16 %v403
    %v1092 = vunpack.c.h.b16 %v403
    %v1093 = vunpack.c.l.b16 %v404
    %v1094 = vunpack.c.h.b16 %v404
    %v1095 = vunpack.c.l.b16 %v405
    %v1096 = vunpack.c.h.b16 %v405
    %v1097 = vunpack.c.l.b16 %v406
    %v1098 = vunpack.c.h.b16 %v406
    %v1099 = vunpack.c.l.b16 %v407
    %v1100 = vunpack.c.h.b16 %v407
    %v1101 = vunpack.c.l.b16 %v408
    %v1102 = vunpack.c.h.b16 %v408
    %v1103 = vunpack.c.l.b16 %v409
    %v1104 = vunpack.c.h.b16 %v409
    %v1105 = vunpack.c.l.b16 %v410
    %v1106 = vunpack.c.h.b16 %v410
    %v1107 = vunpack.c.l.b16 %v411
    %v1108 = vunpack.c.h.b16 %v411
    %v1109 = vunpack.c.l.b16 %v412
    %v1110 = vunpack.c.h.b16 %v412
    %v1111 = vunpack.c.l.b16 %v413
    %v1112 = vunpack.c.h.b16 %v413
    %v1113 = vunpack.c.l.b16 %v414
    %v1114 = vunpack.c.h.b16 %v414
    %v1115 = vunpack.c.l.b16 %v415
    %v1116 = vunpack.c.h.b16 %v415
    %v1117 = vunpack.c.l.b16 %v416
    %v1118 = vunpack.c.h.b16 %v416
    %v1119 = vunpack.c.l.b16 %v417
    %v1120 = vunpack.c.h.b16 %v417
    %v1121 = vunpack.c.l.b16 %v418
    %v1122 = vunpack.c.h.b16 %v418
    %v1123 = vunpack.c.l.b16 %v419
    %v1124 = vunpack.c.h.b16 %v419
    %v1125 = vunpack.c.l.b16 %v420
    %v1126 = vunpack.c.h.b16 %v420
    %v1127 = vunpack.c.l.b16 %v421
    %v1128 = vunpack.c.h.b16 %v421
    %v1129 = vunpack.c.l.b16 %v422
    %v1130 = vunpack.c.h.b16 %v422
    %v1131 = vunpack.c.l.b16 %v423
    %v1132 = vunpack.c.h.b16 %v423
    %v1133 = vunpack.c.l.b16 %v424
    %v1134 = vunpack.c.h.b16 %v424
    %v1135 = vunpack.c.l.b16 %v425
    %v1136 = vunpack.c.h.b16 %v425
    %v1137 = vunpack.c.l.b16 %v426
    %v1138 = vunpack.c.h.b16 %v426
    %v1139 = vunpack.c.l.b16 %v427
    %v1140 = vunpack.c.h.b16 %v427
    %v1141 = vunpack.c.l.b16 %v428
    %v1142 = vunpack.c.h.b16 %v428
    %v1143 = vunpack.c.l.b16 %v429
    %v1144 = vunpack.c.h.b16 %v429
    %v1145 = vunpack.c.l.b16 %v430
    %v1146 = vunpack.c.h.b16 %v430
    %v1147 = vunpack.c.l.b16 %v431
    %v1148 = vunpack.c.h.b16 %v431
    %v1149 = vunpack.c.l.b16 %v432
    %v1150 = vunpack.c.h.b16 %v432
    %v1151 = vunpack.c.l.b16 %v433
    %v1152 = vunpack.c.h.b16 %v433
    %v1153 = vunpack.c.l.b16 %v434
    %v1154 = vunpack.c.h.b16 %v434
    %v1155 = vunpack.c.l.b16 %v435
    %v1156 = vunpack.c.h.b16 %v435
    %v1157 = vunpack.c.l.b16 %v436
    %v1158 = vunpack.c.h.b16 %v436
    %v1159 = vunpack.c.l.b16 %v437
    %v1160 = vunpack.c.h.b16 %v437
    %v1161 = vunpack.c.l.b16 %v438
    %v1162 = vunpack.c.h.b16 %v438
    %v1163 = vunpack.c.l.b16 %v439
    %v1164 = vunpack.c.h.b16 %v439
    %v1165 = vunpack.c.l.b16 %v440
    %v1166 = vunpack.c.h.b16 %v440
    %v1167 = vunpack.c.l.b16 %v441
    %v1168 = vunpack.c.h.b16 %v441
    %v1169 = vunpack.c.l.b16 %v442
    %v1170 = vunpack.c.h.b16 %v442
    %v1171 = vunpack.c.l.b16 %v443
    %v1172 = vunpack.c.h.b16 %v443
    %v1173 = vunpack.c.l.b16 %v444
    %v1174 = vunpack.c.h.b16 %v444
    %v1175 = vunpack.c.l.b16 %v445
    %v1176 = vunpack.c.h.b16 %v445
    %v1177 = vunpack.c.l.b16 %v446
    %v1178 = vunpack.c.h.b16 %v446
    %v1179 = vunpack.c.l.b16 %v447
    %v1180 = vunpack.c.h.b16 %v447
    %v1181 = vunpack.c.l.b16 %v448
    %v1182 = vunpack.c.h.b16 %v448
    %v1183 = vunpack.c.l.b16 %v449
    %v1184 = vunpack.c.h.b16 %v449
    %v1185 = vunpack.c.l.b16 %v450
    %v1186 = vunpack.c.h.b16 %v450
    %v1187 = vunpack.c.l.b16 %v451
    %v1188 = vunpack.c.h.b16 %v451
    %v1189 = vunpack.c.l.b16 %v452
    %v1190 = vunpack.c.h.b16 %v452
    %v1191 = vunpack.c.l.b16 %v453
    %v1192 = vunpack.c.h.b16 %v453
    %v1193 = vunpack.c.l.b16 %v454
    %v1194 = vunpack.c.h.b16 %v454
    %v1195 = vunpack.c.l.b16 %v455
    %v1196 = vunpack.c.h.b16 %v455
    %v1197 = vunpack.c.l.b16 %v456
    %v1198 = vunpack.c.h.b16 %v456
    %v1199 = vunpack.c.l.b16 %v457
    %v1200 = vunpack.c.h.b16 %v457
    %v1201 = vunpack.c.l.b16 %v458
    %v1202 = vunpack.c.h.b16 %v458
    %v1203 = vunpack.c.l.b16 %v459
    %v1204 = vunpack.c.h.b16 %v459
    %v1205 = vunpack.c.l.b16 %v460
    %v1206 = vunpack.c.h.b16 %v460
    %v1207 = vunpack.c.l.b16 %v461
    %v1208 = vunpack.c.h.b16 %v461
    %v1209 = vunpack.c.l.b16 %v462
    %v1210 = vunpack.c.h.b16 %v462
    %v1211 = vunpack.c.l.b16 %v463
    %v1212 = vunpack.c.h.b16 %v463
    %v1213 = vunpack.c.l.b16 %v464
    %v1214 = vunpack.c.h.b16 %v464
    %v1215 = vunpack.c.l.b16 %v465
    %v1216 = vunpack.c.h.b16 %v465
    %v1217 = vunpack.c.l.b16 %v466
    %v1218 = vunpack.c.h.b16 %v466
    %v1219 = vunpack.c.l.b16 %v467
    %v1220 = vunpack.c.h.b16 %v467
    %v1221 = vunpack.c.l.b16 %v468
    %v1222 = vunpack.c.h.b16 %v468
    %v1223 = vunpack.c.l.b16 %v469
    %v1224 = vunpack.c.h.b16 %v469
    %v1225 = vunpack.c.l.b16 %v470
    %v1226 = vunpack.c.h.b16 %v470
    %v1227 = vunpack.c.l.b16 %v471
    %v1228 = vunpack.c.h.b16 %v471
    %v1229 = vunpack.c.l.b16 %v472
    %v1230 = vunpack.c.h.b16 %v472
    %v1231 = vunpack.c.l.b16 %v473
    %v1232 = vunpack.c.h.b16 %v473
    %v1233 = vunpack.c.l.b16 %v474
    %v1234 = vunpack.c.h.b16 %v474
    %v1235 = vunpack.c.l.b16 %v475
    %v1236 = vunpack.c.h.b16 %v475
    %v1237 = vunpack.c.l.b16 %v476
    %v1238 = vunpack.c.h.b16 %v476
    %v1239 = vunpack.c.l.b16 %v477
    %v1240 = vunpack.c.h.b16 %v477
    %v1241 = vunpack.c.l.b16 %v478
    %v1242 = vunpack.c.h.b16 %v478
    %v1243 = vunpack.c.l.b16 %v479
    %v1244 = vunpack.c.h.b16 %v479
    %v1245 = vunpack.c.l.b16 %v480
    %v1246 = vunpack.c.h.b16 %v480
    %v1247 = vunpack.c.l.b16 %v481
    %v1248 = vunpack.c.h.b16 %v481
    %v1249 = vunpack.c.l.b16 %v482
    %v1250 = vunpack.c.h.b16 %v482
    %v1251 = vunpack.c.l.b16 %v483
    %v1252 = vunpack.c.h.b16 %v483
    %v1253 = vunpack.c.l.b16 %v484
    %v1254 = vunpack.c.h.b16 %v484
    %v1255 = vunpack.c.l.b16 %v485
    %v1256 = vunpack.c.h.b16 %v485
    %v1257 = vunpack.c.l.b16 %v486
    %v1258 = vunpack.c.h.b16 %v486
    %v1259 = vunpack.c.l.b16 %v487
    %v1260 = vunpack.c.h.b16 %v487
    %v1261 = vunpack.c.l.b16 %v488
    %v1262 = vunpack.c.h.b16 %v488
    %v1263 = vunpack.c.l.b16 %v489
    %v1264 = vunpack.c.h.b16 %v489
    %v1265 = vunpack.c.l.b16 %v490
    %v1266 = vunpack.c.h.b16 %v490
    %v1267 = vunpack.c.l.b16 %v491
    %v1268 = vunpack.c.h.b16 %v491
    %v1269 = vunpack.c.l.b16 %v492
    %v1270 = vunpack.c.h.b16 %v492
    %v1271 = vunpack.c.l.b16 %v493
    %v1272 = vunpack.c.h.b16 %v493
    %v1273 = vunpack.c.l.b16 %v494
    %v1274 = vunpack.c.h.b16 %v494
    %v1275 = vunpack.c.l.b16 %v495
    %v1276 = vunpack.c.h.b16 %v495
    %v1277 = vunpack.c.l.b16 %v496
    %v1278 = vunpack.c.h.b16 %v496
    %v1279 = vunpack.c.l.b16 %v497
    %v1280 = vunpack.c.h.b16 %v497
    %v1281 = vunpack.c.l.b16 %v498
    %v1282 = vunpack.c.h.b16 %v498
    %v1283 = vunpack.c.l.b16 %v499
    %v1284 = vunpack.c.h.b16 %v499
    %v1285 = vunpack.c.l.b16 %v500
    %v1286 = vunpack.c.h.b16 %v500
    %v1287 = vunpack.c.l.b16 %v501
    %v1288 = vunpack.c.h.b16 %v501
    %v1289 = vunpack.c.l.b16 %v502
    %v1290 = vunpack.c.h.b16 %v502
    %v1291 = vunpack.c.l.b16 %v503
    %v1292 = vunpack.c.h.b16 %v503
    %v1293 = vunpack.c.l.b16 %v504
    %v1294 = vunpack.c.h.b16 %v504
    %v1295 = vunpack.c.l.b16 %v505
    %v1296 = vunpack.c.h.b16 %v505
    %v1297 = vunpack.c.l.b16 %v506
    %v1298 = vunpack.c.h.b16 %v506
    %v1299 = vunpack.c.l.b16 %v507
    %v1300 = vunpack.c.h.b16 %v507
    %v1301 = vunpack.c.l.b16 %v508
    %v1302 = vunpack.c.h.b16 %v508
    %v1303 = vunpack.c.l.b16 %v509
    %v1304 = vunpack.c.h.b16 %v509
    %v1305 = vunpack.c.l.b16 %v510
    %v1306 = vunpack.c.h.b16 %v510
    %v1307 = vunpack.c.l.b16 %v511
    %v1308 = vunpack.c.h.b16 %v511
    %v1309 = vunpack.c.l.b16 %v512
    %v1310 = vunpack.c.h.b16 %v512
    %v1311 = vunpack.c.l.b16 %v513
    %v1312 = vunpack.c.h.b16 %v513
    %v1313 = vunpack.c.l.b16 %v514
    %v1314 = vunpack.c.h.b16 %v514
    %v1315 = vunpack.c.l.b16 %v515
    %v1316 = vunpack.c.h.b16 %v515
    %v1317 = vunpack.c.l.b16 %v516
    %v1318 = vunpack.c.h.b16 %v516
    %v1319 = vunpack.c.l.b16 %v517
    %v1320 = vunpack.c.h.b16 %v517
    %v1321 = vunpack.c.l.b16 %v518
    %v1322 = vunpack.c.h.b16 %v518
    %v1323 = vunpack.c.l.b16 %v519
    %v1324 = vunpack.c.h.b16 %v519
    %v1325 = vunpack.c.l.b16 %v520
    %v1326 = vunpack.c.h.b16 %v520
    %v1327 = vunpack.c.l.b16 %v521
    %v1328 = vunpack.c.h.b16 %v521
    %v1329 = vunpack.c.l.b16 %v522
    %v1330 = vunpack.c.h.b16 %v522
    %v1331 = vunpack.c.l.b16 %v523
    %v1332 = vunpack.c.h.b16 %v523
    %v1333 = vunpack.c.l.b16 %v524
    %v1334 = vunpack.c.h.b16 %v524
    %v1335 = vpack.c.b16 %v831, %v823
    %v1336 = vpack.c.b16 %v832, %v824
    %v1337 = vpack.c.b16 %v833, %v825
    %v1338 = vpack.c.b16 %v834, %v826
    %v1339 = vpack.c.b16 %v835, %v827
    %v1340 = vpack.c.b16 %v836, %v828
    %v1341 = vpack.c.b16 %v837, %v829
    %v1342 = vpack.c.b16 %v838, %v830
    %v1343 = vpack.c.b16 %v847, %v839
    %v1344 = vpack.c.b16 %v848, %v840
    %v1345 = vpack.c.b16 %v849, %v841
    %v1346 = vpack.c.b16 %v850, %v842
    %v1347 = vpack.c.b16 %v851, %v843
    %v1348 = vpack.c.b16 %v852, %v844
    %v1349 = vpack.c.b16 %v853, %v845
    %v1350 = vpack.c.b16 %v854, %v846
    %v1351 = vpack.c.b16 %v863, %v855
    %v1352 = vpack.c.b16 %v864, %v856
    %v1353 = vpack.c.b16 %v865, %v857
    %v1354 = vpack.c.b16 %v866, %v858
    %v1355 = vpack.c.b16 %v867, %v859
    %v1356 = vpack.c.b16 %v868, %v860
    %v1357 = vpack.c.b16 %v869, %v861
    %v1358 = vpack.c.b16 %v870, %v862
    %v1359 = vpack.c.b16 %v879, %v871
    %v1360 = vpack.c.b16 %v880, %v872
    %v1361 = vpack.c.b16 %v881, %v873
    %v1362 = vpack.c.b16 %v882, %v874
    %v1363 = vpack.c.b16 %v883, %v875
    %v1364 = vpack.c.b16 %v884, %v876
    %v1365 = vpack.c.b16 %v885, %v877
    %v1366 = vpack.c.b16 %v886, %v878
    %v1367 = vpack.c.b16 %v895, %v887
    %v1368 = vpack.c.b16 %v896, %v888
    %v1369 = vpack.c.b16 %v897, %v889
    %v1370 = vpack.c.b16 %v898, %v890
    %v1371 = vpack.c.b16 %v899, %v891
    %v1372 = vpack.c.b16 %v900, %v892
    %v1373 = vpack.c.b16 %v901, %v893
    %v1374 = vpack.c.b16 %v902, %v894
    %v1375 = vpack.c.b16 %v911, %v903
    %v1376 = vpack.c.b16 %v912, %v904
    %v1377 = vpack.c.b16 %v913, %v905
    %v1378 = vpack.c.b16 %v914, %v906
    %v1379 = vpack.c.b16 %v915, %v907
    %v1380 = vpack.c.b16 %v916, %v908
    %v1381 = vpack.c.b16 %v917, %v909
    %v1382 = vpack.c.b16 %v918, %v910
    %v1383 = vpack.c.b16 %v927, %v919
    %v1384 = vpack.c.b16 %v928, %v920
    %v1385 = vpack.c.b16 %v929, %v921
    %v1386 = vpack.c.b16 %v930, %v922
    %v1387 = vpack.c.b16 %v931, %v923
    %v1388 = vpack.c.b16 %v932, %v924
    %v1389 = vpack.c.b16 %v933, %v925
    %v1390 = vpack.c.b16 %v934, %v926
    %v1391 = vpack.c.b16 %v943, %v935
    %v1392 = vpack.c.b16 %v944, %v936
    %v1393 = vpack.c.b16 %v945, %v937
    %v1394 = vpack.c.b16 %v946, %v938
    %v1395 = vpack.c.b16 %v947, %v939
    %v1396 = vpack.c.b16 %v948, %v940
    %v1397 = vpack.c.b16 %v949, %v941
    %v1398 = vpack.c.b16 %v950, %v942
    %v1399 = vpack.c.b16 %v959, %v951
    %v1400 = vpack.c.b16 %v960, %v952
    %v1401 = vpack.c.b16 %v961, %v953
    %v1402 = vpack.c.b16 %v962, %v954
    %v1403 = vpack.c.b16 %v963, %v955
    %v1404 = vpack.c.b16 %v964, %v956
    %v1405 = vpack.c.b16 %v965, %v957
    %v1406 = vpack.c.b16 %v966, %v958
    %v1407 = vpack.c.b16 %v975, %v967
    %v1408 = vpack.c.b16 %v976, %v968
    %v1409 = vpack.c.b16 %v977, %v969
    %v1410 = vpack.c.b16 %v978, %v970
    %v1411 = vpack.c.b16 %v979, %v971
    %v1412 = vpack.c.b16 %v980, %v972
    %v1413 = vpack.c.b16 %v981, %v973
    %v1414 = vpack.c.b16 %v982, %v974
    %v1415 = vpack.c.b16 %v991, %v983
    %v1416 = vpack.c.b16 %v992, %v984
    %v1417 = vpack.c.b16 %v993, %v985
    %v1418 = vpack.c.b16 %v994, %v986
    %v1419 = vpack.c.b16 %v995, %v987
    %v1420 = vpack.c.b16 %v996, %v988
    %v1421 = vpack.c.b16 %v997, %v989
    %v1422 = vpack.c.b16 %v998, %v990
    %v1423 = vpack.c.b16 %v1007, %v999
    %v1424 = vpack.c.b16 %v1008, %v1000
    %v1425 = vpack.c.b16 %v1009, %v1001
    %v1426 = vpack.c.b16 %v1010, %v1002
    %v1427 = vpack.c.b16 %v1011, %v1003
    %v1428 = vpack.c.b16 %v1012, %v1004
    %v1429 = vpack.c.b16 %v1013, %v1005
    %v1430 = vpack.c.b16 %v1014, %v1006
    %v1431 = vpack.c.b16 %v1023, %v1015
    %v1432 = vpack.c.b16 %v1024, %v1016
    %v1433 = vpack.c.b16 %v1025, %v1017
    %v1434 = vpack.c.b16 %v1026, %v1018
    %v1435 = vpack.c.b16 %v1027, %v1019
    %v1436 = vpack.c.b16 %v1028, %v1020
    %v1437 = vpack.c.b16 %v1029, %v1021
    %v1438 = vpack.c.b16 %v1030, %v1022
    %v1439 = vpack.c.b16 %v1039, %v1031
    %v1440 = vpack.c.b16 %v1040, %v1032
    %v1441 = vpack.c.b16 %v1041, %v1033
    %v1442 = vpack.c.b16 %v1042, %v1034
    %v1443 = vpack.c.b16 %v1043, %v1035
    %v1444 = vpack.c.b16 %v1044, %v1036
    %v1445 = vpack.c.b16 %v1045, %v1037
    %v1446 = vpack.c.b16 %v1046, %v1038
    %v1447 = vpack.c.b16 %v1055, %v1047
    %v1448 = vpack.c.b16 %v1056, %v1048
    %v1449 = vpack.c.b16 %v1057, %v1049
    %v1450 = vpack.c.b16 %v1058, %v1050
    %v1451 = vpack.c.b16 %v1059, %v1051
    %v1452 = vpack.c.b16 %v1060, %v1052
    %v1453 = vpack.c.b16 %v1061, %v1053
    %v1454 = vpack.c.b16 %v1062, %v1054
    %v1455 = vpack.c.b16 %v1071, %v1063
    %v1456 = vpack.c.b16 %v1072, %v1064
    %v1457 = vpack.c.b16 %v1073, %v1065
    %v1458 = vpack.c.b16 %v1074, %v1066
    %v1459 = vpack.c.b16 %v1075, %v1067
    %v1460 = vpack.c.b16 %v1076, %v1068
    %v1461 = vpack.c.b16 %v1077, %v1069
    %v1462 = vpack.c.b16 %v1078, %v1070
    %v1463 = vpack.c.b16 %v1087, %v1079
    %v1464 = vpack.c.b16 %v1088, %v1080
    %v1465 = vpack.c.b16 %v1089, %v1081
    %v1466 = vpack.c.b16 %v1090, %v1082
    %v1467 = vpack.c.b16 %v1091, %v1083
    %v1468 = vpack.c.b16 %v1092, %v1084
    %v1469 = vpack.c.b16 %v1093, %v1085
    %v1470 = vpack.c.b16 %v1094, %v1086
    %v1471 = vpack.c.b16 %v1103, %v1095
    %v1472 = vpack.c.b16 %v1104, %v1096
    %v1473 = vpack.c.b16 %v1105, %v1097
    %v1474 = vpack.c.b16 %v1106, %v1098
    %v1475 = vpack.c.b16 %v1107, %v1099
    %v1476 = vpack.c.b16 %v1108, %v1100
    %v1477 = vpack.c.b16 %v1109, %v1101
    %v1478 = vpack.c.b16 %v1110, %v1102
    %v1479 = vpack.c.b16 %v1119, %v1111
    %v1480 = vpack.c.b16 %v1120, %v1112
    %v1481 = vpack.c.b16 %v1121, %v1113
    %v1482 = vpack.c.b16 %v1122, %v1114
    %v1483 = vpack.c.b16 %v1123, %v1115
    %v1484 = vpack.c.b16 %v1124, %v1116
    %v1485 = vpack.c.b16 %v1125, %v1117
    %v1486 = vpack.c.b16 %v1126, %v1118
    %v1487 = vpack.c.b16 %v1135, %v1127
    %v1488 = vpack.c.b16 %v1136, %v1128
    %v1489 = vpack.c.b16 %v1137, %v1129
    %v1490 = vpack.c.b16 %v1138, %v1130
    %v1491 = vpack.c.b16 %v1139, %v1131
    %v1492 = vpack.c.b16 %v1140, %v1132
    %v1493 = vpack.c.b16 %v1141, %v1133
    %v1494 = vpack.c.b16 %v1142, %v1134
    %v1495 = vpack.c.b16 %v1151, %v1143
    %v1496 = vpack.c.b16 %v1152, %v1144
    %v1497 = vpack.c.b16 %v1153, %v1145
    %v1498 = vpack.c.b16 %v1154, %v1146
    %v1499 = vpack.c.b16 %v1155, %v1147
    %v1500 = vpack.c.b16 %v1156, %v1148
    %v1501 = vpack.c.b16 %v1157, %v1149
    %v1502 = vpack.c.b16 %v1158, %v1150
    %v1503 = vpack.c.b16 %v1167, %v1159
    %v1504 = vpack.c.b16 %v1168, %v1160
    %v1505 = vpack.c.b16 %v1169, %v1161
    %v1506 = vpack.c.b16 %v1170, %v1162
    %v1507 = vpack.c.b16 %v1171, %v1163
    %v1508 = vpack.c.b16 %v1172, %v1164
    %v1509 = vpack.c.b16 %v1173, %v1165
    %v1510 = vpack.c.b16 %v1174, %v1166
    %v1511 = vpack.c.b16 %v1183, %v1175
    %v1512 = vpack.c.b16 %v1184, %v1176
    %v1513 = vpack.c.b16 %v1185, %v1177
    %v1514 = vpack.c.b16 %v1186, %v1178
    %v1515 = vpack.c.b16 %v1187, %v1179
    %v1516 = vpack.c.b16 %v1188, %v1180
    %v1517 = vpack.c.b16 %v1189, %v1181
    %v1518 = vpack.c.b16 %v1190, %v1182
    %v1519 = vpack.c.b16 %v1199, %v1191
    %v1520 = vpack.c.b16 %v1200, %v1192
    %v1521 = vpack.c.b16 %v1201, %v1193
    %v1522 = vpack.c.b16 %v1202, %v1194
    %v1523 = vpack.c.b16 %v1203, %v1195
    %v1524 = vpack.c.b16 %v1204, %v1196
    %v1525 = vpack.c.b16 %v1205, %v1197
    %v1526 = vpack.c.b16 %v1206, %v1198
    %v1527 = vpack.c.b16 %v1215, %v1207
    %v1528 = vpack.c.b16 %v1216, %v1208
    %v1529 = vpack.c.b16 %v1217, %v1209
    %v1530 = vpack.c.b16 %v1218, %v1210
    %v1531 = vpack.c.b16 %v1219, %v1211
    %v1532 = vpack.c.b16 %v1220, %v1212
    %v1533 = vpack.c.b16 %v1221, %v1213
    %v1534 = vpack.c.b16 %v1222, %v1214
    %v1535 = vpack.c.b16 %v1231, %v1223
    %v1536 = vpack.c.b16 %v1232, %v1224
    %v1537 = vpack.c.b16 %v1233, %v1225
    %v1538 = vpack.c.b16 %v1234, %v1226
    %v1539 = vpack.c.b16 %v1235, %v1227
    %v1540 = vpack.c.b16 %v1236, %v1228
    %v1541 = vpack.c.b16 %v1237, %v1229
    %v1542 = vpack.c.b16 %v1238, %v1230
    %v1543 = vpack.c.b16 %v1247, %v1239
    %v1544 = vpack.c.b16 %v1248, %v1240
    %v1545 = vpack.c.b16 %v1249, %v1241
    %v1546 = vpack.c.b16 %v1250, %v1242
    %v1547 = vpack.c.b16 %v1251, %v1243
    %v1548 = vpack.c.b16 %v1252, %v1244
    %v1549 = vpack.c.b16 %v1253, %v1245
    %v1550 = vpack.c.b16 %v1254, %v1246
    %v1551 = vpack.c.b16 %v1263, %v1255
    %v1552 = vpack.c.b16 %v1264, %v1256
    %v1553 = vpack.c.b16 %v1265, %v1257
    %v1554 = vpack.c.b16 %v1266, %v1258
    %v1555 = vpack.c.b16 %v1267, %v1259
    %v1556 = vpack.c.b16 %v1268, %v1260
    %v1557 = vpack.c.b16 %v1269, %v1261
    %v1558 = vpack.c.b16 %v1270, %v1262
    %v1559 = vpack.c.b16 %v1279, %v1271
    %v1560 = vpack.c.b16 %v1280, %v1272
    %v1561 = vpack.c.b16 %v1281, %v1273
    %v1562 = vpack.c.b16 %v1282, %v1274
    %v1563 = vpack.c.b16 %v1283, %v1275
    %v1564 = vpack.c.b16 %v1284, %v1276
    %v1565 = vpack.c.b16 %v1285, %v1277
    %v1566 = vpack.c.b16 %v1286, %v1278
    %v1567 = vpack.c.b16 %v1295, %v1287
    %v1568 = vpack.c.b16 %v1296, %v1288
    %v1569 = vpack.c.b16 %v1297, %v1289
    %v1570 = vpack.c.b16 %v1298, %v1290
    %v1571 = vpack.c.b16 %v1299, %v1291
    %v1572 = vpack.c.b16 %v1300, %v1292
    %v1573 = vpack.c.b16 %v1301, %v1293
    %v1574 = vpack.c.b16 %v1302, %v1294
    %v1575 = vpack.c.b16 %v1311, %v1303
    %v1576 = vpack.c.b16 %v1312, %v1304
    %v1577 = vpack.c.b16 %v1313, %v1305
    %v1578 = vpack.c.b16 %v1314, %v1306
    %v1579 = vpack.c.b16 %v1315, %v1307
    %v1580 = vpack.c.b16 %v1316, %v1308
    %v1581 = vpack.c.b16 %v1317, %v1309
    %v1582 = vpack.c.b16 %v1318, %v1310
    %v1583 = vpack.c.b16 %v1327, %v1319
    %v1584 = vpack.c.b16 %v1328, %v1320
    %v1585 = vpack.c.b16 %v1329, %v1321
    %v1586 = vpack.c.b16 %v1330, %v1322
    %v1587 = vpack.c.b16 %v1331, %v1323
    %v1588 = vpack.c.b16 %v1332, %v1324
    %v1589 = vpack.c.b16 %v1333, %v1325
    %v1590 = vpack.c.b16 %v1334, %v1326
    %1847 = vmatprep.subr.bf16.mxu0 %v1392
    %1848 = vmatpush1.bf16.msra.mxu0 %v1391
    %1849 = vmatprep.subr.bf16.mxu0 %v1384
    %1850 = vmatpush1.bf16.msra.mxu0 %v1383
    %1851 = vmatprep.subr.bf16.mxu0 %v1376
    %1852 = vmatpush1.bf16.msra.mxu0 %v1375
    %1853 = vmatprep.subr.bf16.mxu0 %v1368
    %1854 = vmatpush1.bf16.msra.mxu0 %v1367
    %1855 = vmatprep.subr.bf16.mxu0 %v1360
    %1856 = vmatpush1.bf16.msra.mxu0 %v1359
    %1857 = vmatprep.subr.bf16.mxu0 %v1352
    %1858 = vmatpush1.bf16.msra.mxu0 %v1351
    %1859 = vmatprep.subr.bf16.mxu0 %v1344
    %1860 = vmatpush1.bf16.msra.mxu0 %v1343
    %1861 = vmatprep.subr.bf16.mxu0 %v1336
    %1862 = vmatpush1.bf16.msra.mxu0 %v1335
    %1863 = vmatprep.subr.bf16.mxu0 %v1456
    %1864 = vmatpush2.bf16.msra.mxu0 %v1455
    %1865 = vmatprep.subr.bf16.mxu0 %v1448
    %1866 = vmatpush2.bf16.msra.mxu0 %v1447
    %1867 = vmatprep.subr.bf16.mxu0 %v1440
    %1868 = vmatpush2.bf16.msra.mxu0 %v1439
    %1869 = vmatprep.subr.bf16.mxu0 %v1432
    %1870 = vmatpush2.bf16.msra.mxu0 %v1431
    %1871 = vmatprep.subr.bf16.mxu0 %v1424
    %1872 = vmatpush2.bf16.msra.mxu0 %v1423
    %1873 = vmatprep.subr.bf16.mxu0 %v1416
    %1874 = vmatpush2.bf16.msra.mxu0 %v1415
    %1875 = vmatprep.subr.bf16.mxu0 %v1408
    %1876 = vmatpush2.bf16.msra.mxu0 %v1407
    %1877 = vmatprep.subr.bf16.mxu0 %v1400
    %1878 = vmatpush2.bf16.msra.mxu0 %v1399
    %1879 = vmatprep.mubr.bf16.mxu0 %v266
    %1880 = vmatmul.mubr.bf16.gmra.mxu0 %v265
    %v1881 = vpop.f32.mrf.mxu0
    %v1882 = vadd.f32 %v530, %v1881
    %v1883 = vpop.f32.mrf.mxu0
    %v1884 = vadd.f32 %v534, %v1883
    %v1885 = vpop.f32.mrf.mxu0
    %v1886 = vpop.f32.mrf.mxu0
    %1887 = vdwg.mxu0
    %1888 = vmatprep.subr.bf16.mxu0 %v1520
    %1889 = vmatpush1.bf16.msra.mxu0 %v1519
    %1890 = vmatprep.subr.bf16.mxu0 %v1512
    %1891 = vmatpush1.bf16.msra.mxu0 %v1511
    %1892 = vmatprep.subr.bf16.mxu0 %v1504
    %1893 = vmatpush1.bf16.msra.mxu0 %v1503
    %1894 = vmatprep.subr.bf16.mxu0 %v1496
    %1895 = vmatpush1.bf16.msra.mxu0 %v1495
    %1896 = vmatprep.subr.bf16.mxu0 %v1488
    %1897 = vmatpush1.bf16.msra.mxu0 %v1487
    %1898 = vmatprep.subr.bf16.mxu0 %v1480
    %1899 = vmatpush1.bf16.msra.mxu0 %v1479
    %1900 = vmatprep.subr.bf16.mxu0 %v1472
    %1901 = vmatpush1.bf16.msra.mxu0 %v1471
    %1902 = vmatprep.subr.bf16.mxu0 %v1464
    %1903 = vmatpush1.bf16.msra.mxu0 %v1463
    %1904 = vmatprep.subr.bf16.mxu0 %v1584
    %1905 = vmatpush2.bf16.msra.mxu0 %v1583
    %1906 = vmatprep.subr.bf16.mxu0 %v1576
    %1907 = vmatpush2.bf16.msra.mxu0 %v1575
    %1908 = vmatprep.subr.bf16.mxu0 %v1568
    %1909 = vmatpush2.bf16.msra.mxu0 %v1567
    %1910 = vmatprep.subr.bf16.mxu0 %v1560
    %1911 = vmatpush2.bf16.msra.mxu0 %v1559
    %1912 = vmatprep.subr.bf16.mxu0 %v1552
    %1913 = vmatpush2.bf16.msra.mxu0 %v1551
    %1914 = vmatprep.subr.bf16.mxu0 %v1544
    %1915 = vmatpush2.bf16.msra.mxu0 %v1543
    %1916 = vmatprep.subr.bf16.mxu0 %v1536
    %1917 = vmatpush2.bf16.msra.mxu0 %v1535
    %1918 = vmatprep.subr.bf16.mxu0 %v1528
    %1919 = vmatpush2.bf16.msra.mxu0 %v1527
    %1920 = vmatprep.mubr.bf16.mxu0 %v268
    %1921 = vmatmul.mubr.bf16.gmra.mxu0 %v267
    %v1922 = vpop.f32.mrf.mxu0
    %v1923 = vadd.f32 %v1882, %v1922
    %v1924 = vpop.f32.mrf.mxu0
    %v1925 = vadd.f32 %v1884, %v1924
    %v1926 = vpop.f32.mrf.mxu0
    %v1927 = vpop.f32.mrf.mxu0
    %1928 = vdwg.mxu0
    %1929 = vmatprep.subr.bf16.mxu0 %v1394
    %1930 = vmatpush1.bf16.msra.mxu0 %v1393
    %1931 = vmatprep.subr.bf16.mxu0 %v1386
    %1932 = vmatpush1.bf16.msra.mxu0 %v1385
    %1933 = vmatprep.subr.bf16.mxu0 %v1378
    %1934 = vmatpush1.bf16.msra.mxu0 %v1377
    %1935 = vmatprep.subr.bf16.mxu0 %v1370
    %1936 = vmatpush1.bf16.msra.mxu0 %v1369
    %1937 = vmatprep.subr.bf16.mxu0 %v1362
    %1938 = vmatpush1.bf16.msra.mxu0 %v1361
    %1939 = vmatprep.subr.bf16.mxu0 %v1354
    %1940 = vmatpush1.bf16.msra.mxu0 %v1353
    %1941 = vmatprep.subr.bf16.mxu0 %v1346
    %1942 = vmatpush1.bf16.msra.mxu0 %v1345
    %1943 = vmatprep.subr.bf16.mxu0 %v1338
    %1944 = vmatpush1.bf16.msra.mxu0 %v1337
    %1945 = vmatprep.subr.bf16.mxu0 %v1458
    %1946 = vmatpush2.bf16.msra.mxu0 %v1457
    %1947 = vmatprep.subr.bf16.mxu0 %v1450
    %1948 = vmatpush2.bf16.msra.mxu0 %v1449
    %1949 = vmatprep.subr.bf16.mxu0 %v1442
    %1950 = vmatpush2.bf16.msra.mxu0 %v1441
    %1951 = vmatprep.subr.bf16.mxu0 %v1434
    %1952 = vmatpush2.bf16.msra.mxu0 %v1433
    %1953 = vmatprep.subr.bf16.mxu0 %v1426
    %1954 = vmatpush2.bf16.msra.mxu0 %v1425
    %1955 = vmatprep.subr.bf16.mxu0 %v1418
    %1956 = vmatpush2.bf16.msra.mxu0 %v1417
    %1957 = vmatprep.subr.bf16.mxu0 %v1410
    %1958 = vmatpush2.bf16.msra.mxu0 %v1409
    %1959 = vmatprep.subr.bf16.mxu0 %v1402
    %1960 = vmatpush2.bf16.msra.mxu0 %v1401
    %1961 = vmatprep.mubr.bf16.mxu0 %v266
    %1962 = vmatmul.mubr.bf16.gmra.mxu0 %v265
    %v1963 = vpop.f32.mrf.mxu0
    %v1964 = vadd.f32 %v538, %v1963
    %v1965 = vpop.f32.mrf.mxu0
    %v1966 = vadd.f32 %v542, %v1965
    %v1967 = vpop.f32.mrf.mxu0
    %v1968 = vpop.f32.mrf.mxu0
    %1969 = vdwg.mxu0
    %1970 = vmatprep.subr.bf16.mxu0 %v1522
    %1971 = vmatpush1.bf16.msra.mxu0 %v1521
    %1972 = vmatprep.subr.bf16.mxu0 %v1514
    %1973 = vmatpush1.bf16.msra.mxu0 %v1513
    %1974 = vmatprep.subr.bf16.mxu0 %v1506
    %1975 = vmatpush1.bf16.msra.mxu0 %v1505
    %1976 = vmatprep.subr.bf16.mxu0 %v1498
    %1977 = vmatpush1.bf16.msra.mxu0 %v1497
    %1978 = vmatprep.subr.bf16.mxu0 %v1490
    %1979 = vmatpush1.bf16.msra.mxu0 %v1489
    %1980 = vmatprep.subr.bf16.mxu0 %v1482
    %1981 = vmatpush1.bf16.msra.mxu0 %v1481
    %1982 = vmatprep.subr.bf16.mxu0 %v1474
    %1983 = vmatpush1.bf16.msra.mxu0 %v1473
    %1984 = vmatprep.subr.bf16.mxu0 %v1466
    %1985 = vmatpush1.bf16.msra.mxu0 %v1465
    %1986 = vmatprep.subr.bf16.mxu0 %v1586
    %1987 = vmatpush2.bf16.msra.mxu0 %v1585
    %1988 = vmatprep.subr.bf16.mxu0 %v1578
    %1989 = vmatpush2.bf16.msra.mxu0 %v1577
    %1990 = vmatprep.subr.bf16.mxu0 %v1570
    %1991 = vmatpush2.bf16.msra.mxu0 %v1569
    %1992 = vmatprep.subr.bf16.mxu0 %v1562
    %1993 = vmatpush2.bf16.msra.mxu0 %v1561
    %1994 = vmatprep.subr.bf16.mxu0 %v1554
    %1995 = vmatpush2.bf16.msra.mxu0 %v1553
    %1996 = vmatprep.subr.bf16.mxu0 %v1546
    %1997 = vmatpush2.bf16.msra.mxu0 %v1545
    %1998 = vmatprep.subr.bf16.mxu0 %v1538
    %1999 = vmatpush2.bf16.msra.mxu0 %v1537
    %2000 = vmatprep.subr.bf16.mxu0 %v1530
    %2001 = vmatpush2.bf16.msra.mxu0 %v1529
    %2002 = vmatprep.mubr.bf16.mxu0 %v268
    %2003 = vmatmul.mubr.bf16.gmra.mxu0 %v267
    %v2004 = vpop.f32.mrf.mxu0
    %v2005 = vadd.f32 %v1964, %v2004
    %v2006 = vpop.f32.mrf.mxu0
    %v2007 = vadd.f32 %v1966, %v2006
    %v2008 = vpop.f32.mrf.mxu0
    %v2009 = vpop.f32.mrf.mxu0
    %2010 = vdwg.mxu0
    %2011 = vmatprep.subr.bf16.mxu0 %v1396
    %2012 = vmatpush1.bf16.msra.mxu0 %v1395
    %2013 = vmatprep.subr.bf16.mxu0 %v1388
    %2014 = vmatpush1.bf16.msra.mxu0 %v1387
    %2015 = vmatprep.subr.bf16.mxu0 %v1380
    %2016 = vmatpush1.bf16.msra.mxu0 %v1379
    %2017 = vmatprep.subr.bf16.mxu0 %v1372
    %2018 = vmatpush1.bf16.msra.mxu0 %v1371
    %2019 = vmatprep.subr.bf16.mxu0 %v1364
    %2020 = vmatpush1.bf16.msra.mxu0 %v1363
    %2021 = vmatprep.subr.bf16.mxu0 %v1356
    %2022 = vmatpush1.bf16.msra.mxu0 %v1355
    %2023 = vmatprep.subr.bf16.mxu0 %v1348
    %2024 = vmatpush1.bf16.msra.mxu0 %v1347
    %2025 = vmatprep.subr.bf16.mxu0 %v1340
    %2026 = vmatpush1.bf16.msra.mxu0 %v1339
    %2027 = vmatprep.subr.bf16.mxu0 %v1460
    %2028 = vmatpush2.bf16.msra.mxu0 %v1459
    %2029 = vmatprep.subr.bf16.mxu0 %v1452
    %2030 = vmatpush2.bf16.msra.mxu0 %v1451
    %2031 = vmatprep.subr.bf16.mxu0 %v1444
    %2032 = vmatpush2.bf16.msra.mxu0 %v1443
    %2033 = vmatprep.subr.bf16.mxu0 %v1436
    %2034 = vmatpush2.bf16.msra.mxu0 %v1435
    %2035 = vmatprep.subr.bf16.mxu0 %v1428
    %2036 = vmatpush2.bf16.msra.mxu0 %v1427
    %2037 = vmatprep.subr.bf16.mxu0 %v1420
    %2038 = vmatpush2.bf16.msra.mxu0 %v1419
    %2039 = vmatprep.subr.bf16.mxu0 %v1412
    %2040 = vmatpush2.bf16.msra.mxu0 %v1411
    %2041 = vmatprep.subr.bf16.mxu0 %v1404
    %2042 = vmatpush2.bf16.msra.mxu0 %v1403
    %2043 = vmatprep.mubr.bf16.mxu0 %v266
    %2044 = vmatmul.mubr.bf16.gmra.mxu0 %v265
    %v2045 = vpop.f32.mrf.mxu0
    %v2046 = vadd.f32 %v546, %v2045
    %v2047 = vpop.f32.mrf.mxu0
    %v2048 = vadd.f32 %v550, %v2047
    %v2049 = vpop.f32.mrf.mxu0
    %v2050 = vpop.f32.mrf.mxu0
    %2051 = vdwg.mxu0
    %2052 = vmatprep.subr.bf16.mxu0 %v1524
    %2053 = vmatpush1.bf16.msra.mxu0 %v1523
    %2054 = vmatprep.subr.bf16.mxu0 %v1516
    %2055 = vmatpush1.bf16.msra.mxu0 %v1515
    %2056 = vmatprep.subr.bf16.mxu0 %v1508
    %2057 = vmatpush1.bf16.msra.mxu0 %v1507
    %2058 = vmatprep.subr.bf16.mxu0 %v1500
    %2059 = vmatpush1.bf16.msra.mxu0 %v1499
    %2060 = vmatprep.subr.bf16.mxu0 %v1492
    %2061 = vmatpush1.bf16.msra.mxu0 %v1491
    %2062 = vmatprep.subr.bf16.mxu0 %v1484
    %2063 = vmatpush1.bf16.msra.mxu0 %v1483
    %2064 = vmatprep.subr.bf16.mxu0 %v1476
    %2065 = vmatpush1.bf16.msra.mxu0 %v1475
    %2066 = vmatprep.subr.bf16.mxu0 %v1468
    %2067 = vmatpush1.bf16.msra.mxu0 %v1467
    %2068 = vmatprep.subr.bf16.mxu0 %v1588
    %2069 = vmatpush2.bf16.msra.mxu0 %v1587
    %2070 = vmatprep.subr.bf16.mxu0 %v1580
    %2071 = vmatpush2.bf16.msra.mxu0 %v1579
    %2072 = vmatprep.subr.bf16.mxu0 %v1572
    %2073 = vmatpush2.bf16.msra.mxu0 %v1571
    %2074 = vmatprep.subr.bf16.mxu0 %v1564
    %2075 = vmatpush2.bf16.msra.mxu0 %v1563
    %2076 = vmatprep.subr.bf16.mxu0 %v1556
    %2077 = vmatpush2.bf16.msra.mxu0 %v1555
    %2078 = vmatprep.subr.bf16.mxu0 %v1548
    %2079 = vmatpush2.bf16.msra.mxu0 %v1547
    %2080 = vmatprep.subr.bf16.mxu0 %v1540
    %2081 = vmatpush2.bf16.msra.mxu0 %v1539
    %2082 = vmatprep.subr.bf16.mxu0 %v1532
    %2083 = vmatpush2.bf16.msra.mxu0 %v1531
    %2084 = vmatprep.mubr.bf16.mxu0 %v268
    %2085 = vmatmul.mubr.bf16.gmra.mxu0 %v267
    %v2086 = vpop.f32.mrf.mxu0
    %v2087 = vadd.f32 %v2046, %v2086
    %v2088 = vpop.f32.mrf.mxu0
    %v2089 = vadd.f32 %v2048, %v2088
    %v2090 = vpop.f32.mrf.mxu0
    %v2091 = vpop.f32.mrf.mxu0
    %2092 = vdwg.mxu0
    %2093 = vmatprep.subr.bf16.mxu0 %v1398
    %2094 = vmatpush1.bf16.msra.mxu0 %v1397
    %2095 = vmatprep.subr.bf16.mxu0 %v1390
    %2096 = vmatpush1.bf16.msra.mxu0 %v1389
    %2097 = vmatprep.subr.bf16.mxu0 %v1382
    %2098 = vmatpush1.bf16.msra.mxu0 %v1381
    %2099 = vmatprep.subr.bf16.mxu0 %v1374
    %2100 = vmatpush1.bf16.msra.mxu0 %v1373
    %2101 = vmatprep.subr.bf16.mxu0 %v1366
    %2102 = vmatpush1.bf16.msra.mxu0 %v1365
    %2103 = vmatprep.subr.bf16.mxu0 %v1358
    %2104 = vmatpush1.bf16.msra.mxu0 %v1357
    %2105 = vmatprep.subr.bf16.mxu0 %v1350
    %2106 = vmatpush1.bf16.msra.mxu0 %v1349
    %2107 = vmatprep.subr.bf16.mxu0 %v1342
    %2108 = vmatpush1.bf16.msra.mxu0 %v1341
    %2109 = vmatprep.subr.bf16.mxu0 %v1462
    %2110 = vmatpush2.bf16.msra.mxu0 %v1461
    %2111 = vmatprep.subr.bf16.mxu0 %v1454
    %2112 = vmatpush2.bf16.msra.mxu0 %v1453
    %2113 = vmatprep.subr.bf16.mxu0 %v1446
    %2114 = vmatpush2.bf16.msra.mxu0 %v1445
    %2115 = vmatprep.subr.bf16.mxu0 %v1438
    %2116 = vmatpush2.bf16.msra.mxu0 %v1437
    %2117 = vmatprep.subr.bf16.mxu0 %v1430
    %2118 = vmatpush2.bf16.msra.mxu0 %v1429
    %2119 = vmatprep.subr.bf16.mxu0 %v1422
    %2120 = vmatpush2.bf16.msra.mxu0 %v1421
    %2121 = vmatprep.subr.bf16.mxu0 %v1414
    %2122 = vmatpush2.bf16.msra.mxu0 %v1413
    %2123 = vmatprep.subr.bf16.mxu0 %v1406
    %2124 = vmatpush2.bf16.msra.mxu0 %v1405
    %2125 = vmatprep.mubr.bf16.mxu0 %v266
    %2126 = vmatmul.mubr.bf16.gmra.mxu0 %v265
    %v2127 = vpop.f32.mrf.mxu0
    %v2128 = vadd.f32 %v554, %v2127
    %v2129 = vpop.f32.mrf.mxu0
    %v2130 = vadd.f32 %v558, %v2129
    %v2131 = vpop.f32.mrf.mxu0
    %v2132 = vpop.f32.mrf.mxu0
    %2133 = vdwg.mxu0
    %2134 = vmatprep.subr.bf16.mxu0 %v1526
    %2135 = vmatpush1.bf16.msra.mxu0 %v1525
    %2136 = vmatprep.subr.bf16.mxu0 %v1518
    %2137 = vmatpush1.bf16.msra.mxu0 %v1517
    %2138 = vmatprep.subr.bf16.mxu0 %v1510
    %2139 = vmatpush1.bf16.msra.mxu0 %v1509
    %2140 = vmatprep.subr.bf16.mxu0 %v1502
    %2141 = vmatpush1.bf16.msra.mxu0 %v1501
    %2142 = vmatprep.subr.bf16.mxu0 %v1494
    %2143 = vmatpush1.bf16.msra.mxu0 %v1493
    %2144 = vmatprep.subr.bf16.mxu0 %v1486
    %2145 = vmatpush1.bf16.msra.mxu0 %v1485
    %2146 = vmatprep.subr.bf16.mxu0 %v1478
    %2147 = vmatpush1.bf16.msra.mxu0 %v1477
    %2148 = vmatprep.subr.bf16.mxu0 %v1470
    %2149 = vmatpush1.bf16.msra.mxu0 %v1469
    %2150 = vmatprep.subr.bf16.mxu0 %v1590
    %2151 = vmatpush2.bf16.msra.mxu0 %v1589
    %2152 = vmatprep.subr.bf16.mxu0 %v1582
    %2153 = vmatpush2.bf16.msra.mxu0 %v1581
    %2154 = vmatprep.subr.bf16.mxu0 %v1574
    %2155 = vmatpush2.bf16.msra.mxu0 %v1573
    %2156 = vmatprep.subr.bf16.mxu0 %v1566
    %2157 = vmatpush2.bf16.msra.mxu0 %v1565
    %2158 = vmatprep.subr.bf16.mxu0 %v1558
    %2159 = vmatpush2.bf16.msra.mxu0 %v1557
    %2160 = vmatprep.subr.bf16.mxu0 %v1550
    %2161 = vmatpush2.bf16.msra.mxu0 %v1549
    %2162 = vmatprep.subr.bf16.mxu0 %v1542
    %2163 = vmatpush2.bf16.msra.mxu0 %v1541
    %2164 = vmatprep.subr.bf16.mxu0 %v1534
    %2165 = vmatpush2.bf16.msra.mxu0 %v1533
    %2166 = vmatprep.mubr.bf16.mxu0 %v268
    %2167 = vmatmul.mubr.bf16.gmra.mxu0 %v267
    %v2168 = vpop.f32.mrf.mxu0
    %v2169 = vadd.f32 %v2128, %v2168
    %v2170 = vpop.f32.mrf.mxu0
    %v2171 = vadd.f32 %v2130, %v2170
    %v2172 = vpop.f32.mrf.mxu0
    %v2173 = vpop.f32.mrf.mxu0
    %2174 = vdwg.mxu0
    %v2175 = vmax.f32 %v1923, 0.0
    %v2176 = vmax.f32 %v1925, 0.0
    %v2177 = vmax.f32 %v2005, 0.0
    %v2178 = vmax.f32 %v2007, 0.0
    %v2179 = vmax.f32 %v2087, 0.0
    %v2180 = vmax.f32 %v2089, 0.0
    %v2181 = vmax.f32 %v2169, 0.0
    %v2182 = vmax.f32 %v2171, 0.0
    %v2183 = vpack.c.bf16 %v2175, %v2175
    %v2184 = vpack.c.bf16 %v2176, %v2176
    %v2185 = vpack.c.bf16 %v2177, %v2177
    %v2186 = vpack.c.bf16 %v2178, %v2178
    %v2187 = vpack.c.bf16 %v2179, %v2179
    %v2188 = vpack.c.bf16 %v2180, %v2180
    %v2189 = vpack.c.bf16 %v2181, %v2181
    %v2190 = vpack.c.bf16 %v2182, %v2182
    %v2191 = vld [vmem:[#allocation11] sm:$0xff]
    %v2192 = vld [vmem:[#allocation11 + $0x8] sm:$0xff]
    %v2193 = vld [vmem:[#allocation11 + $0x10] sm:$0xff]
    %v2194 = vld [vmem:[#allocation11 + $0x18] sm:$0xff]
    %v2195 = vld [vmem:[#allocation11 + $0x20] sm:$0xff]
    %v2196 = vld [vmem:[#allocation11 + $0x28] sm:$0xff]
    %v2197 = vld [vmem:[#allocation11 + $0x30] sm:$0xff]
    %v2198 = vld [vmem:[#allocation11 + $0x38] sm:$0xff]
    %v2199 = vld [vmem:[#allocation11 + $0x40] sm:$0xff]
    %v2200 = vld [vmem:[#allocation11 + $0x48] sm:$0xff]
    %v2201 = vld [vmem:[#allocation11 + $0x50] sm:$0xff]
    %v2202 = vld [vmem:[#allocation11 + $0x58] sm:$0xff]
    %v2203 = vld [vmem:[#allocation11 + $0x60] sm:$0xff]
    %v2204 = vld [vmem:[#allocation11 + $0x68] sm:$0xff]
    %v2205 = vld [vmem:[#allocation11 + $0x70] sm:$0xff]
    %v2206 = vld [vmem:[#allocation11 + $0x78] sm:$0xff]
    %v2207 = vld [vmem:[#allocation11 + $0x80] sm:$0xff]
    %v2208 = vld [vmem:[#allocation11 + $0x88] sm:$0xff]
    %v2209 = vld [vmem:[#allocation11 + $0x90] sm:$0xff]
    %v2210 = vld [vmem:[#allocation11 + $0x98] sm:$0xff]
    %v2211 = vld [vmem:[#allocation11 + $0xa0] sm:$0xff]
    %v2212 = vld [vmem:[#allocation11 + $0xa8] sm:$0xff]
    %v2213 = vld [vmem:[#allocation11 + $0xb0] sm:$0xff]
    %v2214 = vld [vmem:[#allocation11 + $0xb8] sm:$0xff]
    %v2215 = vld [vmem:[#allocation11 + $0xc0] sm:$0xff]
    %v2216 = vld [vmem:[#allocation11 + $0xc8] sm:$0xff]
    %v2217 = vld [vmem:[#allocation11 + $0xd0] sm:$0xff]
    %v2218 = vld [vmem:[#allocation11 + $0xd8] sm:$0xff]
    %v2219 = vld [vmem:[#allocation11 + $0xe0] sm:$0xff]
    %v2220 = vld [vmem:[#allocation11 + $0xe8] sm:$0xff]
    %v2221 = vld [vmem:[#allocation11 + $0xf0] sm:$0xff]
    %v2222 = vld [vmem:[#allocation11 + $0xf8] sm:$0xff]
    %v2223 = vld [vmem:[#allocation11 + $0x100] sm:$0xff]
    %v2224 = vld [vmem:[#allocation11 + $0x108] sm:$0xff]
    %v2225 = vld [vmem:[#allocation11 + $0x110] sm:$0xff]
    %v2226 = vld [vmem:[#allocation11 + $0x118] sm:$0xff]
    %v2227 = vld [vmem:[#allocation11 + $0x120] sm:$0xff]
    %v2228 = vld [vmem:[#allocation11 + $0x128] sm:$0xff]
    %v2229 = vld [vmem:[#allocation11 + $0x130] sm:$0xff]
    %v2230 = vld [vmem:[#allocation11 + $0x138] sm:$0xff]
    %v2231 = vld [vmem:[#allocation11 + $0x140] sm:$0xff]
    %v2232 = vld [vmem:[#allocation11 + $0x148] sm:$0xff]
    %v2233 = vld [vmem:[#allocation11 + $0x150] sm:$0xff]
    %v2234 = vld [vmem:[#allocation11 + $0x158] sm:$0xff]
    %v2235 = vld [vmem:[#allocation11 + $0x160] sm:$0xff]
    %v2236 = vld [vmem:[#allocation11 + $0x168] sm:$0xff]
    %v2237 = vld [vmem:[#allocation11 + $0x170] sm:$0xff]
    %v2238 = vld [vmem:[#allocation11 + $0x178] sm:$0xff]
    %v2239 = vld [vmem:[#allocation11 + $0x180] sm:$0xff]
    %v2240 = vld [vmem:[#allocation11 + $0x188] sm:$0xff]
    %v2241 = vld [vmem:[#allocation11 + $0x190] sm:$0xff]
    %v2242 = vld [vmem:[#allocation11 + $0x198] sm:$0xff]
    %v2243 = vld [vmem:[#allocation11 + $0x1a0] sm:$0xff]
    %v2244 = vld [vmem:[#allocation11 + $0x1a8] sm:$0xff]
    %v2245 = vld [vmem:[#allocation11 + $0x1b0] sm:$0xff]
    %v2246 = vld [vmem:[#allocation11 + $0x1b8] sm:$0xff]
    %v2247 = vld [vmem:[#allocation11 + $0x1c0] sm:$0xff]
    %v2248 = vld [vmem:[#allocation11 + $0x1c8] sm:$0xff]
    %v2249 = vld [vmem:[#allocation11 + $0x1d0] sm:$0xff]
    %v2250 = vld [vmem:[#allocation11 + $0x1d8] sm:$0xff]
    %v2251 = vld [vmem:[#allocation11 + $0x1e0] sm:$0xff]
    %v2252 = vld [vmem:[#allocation11 + $0x1e8] sm:$0xff]
    %v2253 = vld [vmem:[#allocation11 + $0x1f0] sm:$0xff]
    %v2254 = vld [vmem:[#allocation11 + $0x1f8] sm:$0xff]
    %v2255 = vld [vmem:[#allocation11 + $0x200] sm:$0xff]
    %v2256 = vld [vmem:[#allocation11 + $0x208] sm:$0xff]
    %v2257 = vld [vmem:[#allocation11 + $0x210] sm:$0xff]
    %v2258 = vld [vmem:[#allocation11 + $0x218] sm:$0xff]
    %v2259 = vld [vmem:[#allocation11 + $0x220] sm:$0xff]
    %v2260 = vld [vmem:[#allocation11 + $0x228] sm:$0xff]
    %v2261 = vld [vmem:[#allocation11 + $0x230] sm:$0xff]
    %v2262 = vld [vmem:[#allocation11 + $0x238] sm:$0xff]
    %v2263 = vld [vmem:[#allocation11 + $0x240] sm:$0xff]
    %v2264 = vld [vmem:[#allocation11 + $0x248] sm:$0xff]
    %v2265 = vld [vmem:[#allocation11 + $0x250] sm:$0xff]
    %v2266 = vld [vmem:[#allocation11 + $0x258] sm:$0xff]
    %v2267 = vld [vmem:[#allocation11 + $0x260] sm:$0xff]
    %v2268 = vld [vmem:[#allocation11 + $0x268] sm:$0xff]
    %v2269 = vld [vmem:[#allocation11 + $0x270] sm:$0xff]
    %v2270 = vld [vmem:[#allocation11 + $0x278] sm:$0xff]
    %v2271 = vld [vmem:[#allocation11 + $0x280] sm:$0xff]
    %v2272 = vld [vmem:[#allocation11 + $0x288] sm:$0xff]
    %v2273 = vld [vmem:[#allocation11 + $0x290] sm:$0xff]
    %v2274 = vld [vmem:[#allocation11 + $0x298] sm:$0xff]
    %v2275 = vld [vmem:[#allocation11 + $0x2a0] sm:$0xff]
    %v2276 = vld [vmem:[#allocation11 + $0x2a8] sm:$0xff]
    %v2277 = vld [vmem:[#allocation11 + $0x2b0] sm:$0xff]
    %v2278 = vld [vmem:[#allocation11 + $0x2b8] sm:$0xff]
    %v2279 = vld [vmem:[#allocation11 + $0x2c0] sm:$0xff]
    %v2280 = vld [vmem:[#allocation11 + $0x2c8] sm:$0xff]
    %v2281 = vld [vmem:[#allocation11 + $0x2d0] sm:$0xff]
    %v2282 = vld [vmem:[#allocation11 + $0x2d8] sm:$0xff]
    %v2283 = vld [vmem:[#allocation11 + $0x2e0] sm:$0xff]
    %v2284 = vld [vmem:[#allocation11 + $0x2e8] sm:$0xff]
    %v2285 = vld [vmem:[#allocation11 + $0x2f0] sm:$0xff]
    %v2286 = vld [vmem:[#allocation11 + $0x2f8] sm:$0xff]
    %v2287 = vld [vmem:[#allocation11 + $0x300] sm:$0xff]
    %v2288 = vld [vmem:[#allocation11 + $0x308] sm:$0xff]
    %v2289 = vld [vmem:[#allocation11 + $0x310] sm:$0xff]
    %v2290 = vld [vmem:[#allocation11 + $0x318] sm:$0xff]
    %v2291 = vld [vmem:[#allocation11 + $0x320] sm:$0xff]
    %v2292 = vld [vmem:[#allocation11 + $0x328] sm:$0xff]
    %v2293 = vld [vmem:[#allocation11 + $0x330] sm:$0xff]
    %v2294 = vld [vmem:[#allocation11 + $0x338] sm:$0xff]
    %v2295 = vld [vmem:[#allocation11 + $0x340] sm:$0xff]
    %v2296 = vld [vmem:[#allocation11 + $0x348] sm:$0xff]
    %v2297 = vld [vmem:[#allocation11 + $0x350] sm:$0xff]
    %v2298 = vld [vmem:[#allocation11 + $0x358] sm:$0xff]
    %v2299 = vld [vmem:[#allocation11 + $0x360] sm:$0xff]
    %v2300 = vld [vmem:[#allocation11 + $0x368] sm:$0xff]
    %v2301 = vld [vmem:[#allocation11 + $0x370] sm:$0xff]
    %v2302 = vld [vmem:[#allocation11 + $0x378] sm:$0xff]
    %v2303 = vld [vmem:[#allocation11 + $0x380] sm:$0xff]
    %v2304 = vld [vmem:[#allocation11 + $0x388] sm:$0xff]
    %v2305 = vld [vmem:[#allocation11 + $0x390] sm:$0xff]
    %v2306 = vld [vmem:[#allocation11 + $0x398] sm:$0xff]
    %v2307 = vld [vmem:[#allocation11 + $0x3a0] sm:$0xff]
    %v2308 = vld [vmem:[#allocation11 + $0x3a8] sm:$0xff]
    %v2309 = vld [vmem:[#allocation11 + $0x3b0] sm:$0xff]
    %v2310 = vld [vmem:[#allocation11 + $0x3b8] sm:$0xff]
    %v2311 = vld [vmem:[#allocation11 + $0x3c0] sm:$0xff]
    %v2312 = vld [vmem:[#allocation11 + $0x3c8] sm:$0xff]
    %v2313 = vld [vmem:[#allocation11 + $0x3d0] sm:$0xff]
    %v2314 = vld [vmem:[#allocation11 + $0x3d8] sm:$0xff]
    %v2315 = vld [vmem:[#allocation11 + $0x3e0] sm:$0xff]
    %v2316 = vld [vmem:[#allocation11 + $0x3e8] sm:$0xff]
    %v2317 = vld [vmem:[#allocation11 + $0x3f0] sm:$0xff]
    %v2318 = vld [vmem:[#allocation11 + $0x3f8] sm:$0xff]
    %v2319 = vld [vmem:[%s6] sm:$0x3]
    %v2321 = vlaneseq
    %v2322 = vshrl.u32 %v2321, 7
    %v2323 = vsub.s32 0, %v2322
    %v2324 = vrot.slane %v2319, %v2323
    %v2325 = vlaneseq
    %v2326 = vshrl.u32 %v2325, 7
    %v2327 = vsub.s32 1, %v2326
    %v2328 = vrot.slane %v2319, %v2327
    %v2459 = vunpack.c.l.b16 %v2191
    %v2460 = vunpack.c.h.b16 %v2191
    %v2461 = vunpack.c.l.b16 %v2192
    %v2462 = vunpack.c.h.b16 %v2192
    %v2463 = vunpack.c.l.b16 %v2193
    %v2464 = vunpack.c.h.b16 %v2193
    %v2465 = vunpack.c.l.b16 %v2194
    %v2466 = vunpack.c.h.b16 %v2194
    %v2467 = vunpack.c.l.b16 %v2195
    %v2468 = vunpack.c.h.b16 %v2195
    %v2469 = vunpack.c.l.b16 %v2196
    %v2470 = vunpack.c.h.b16 %v2196
    %v2471 = vunpack.c.l.b16 %v2197
    %v2472 = vunpack.c.h.b16 %v2197
    %v2473 = vunpack.c.l.b16 %v2198
    %v2474 = vunpack.c.h.b16 %v2198
    %v2475 = vunpack.c.l.b16 %v2199
    %v2476 = vunpack.c.h.b16 %v2199
    %v2477 = vunpack.c.l.b16 %v2200
    %v2478 = vunpack.c.h.b16 %v2200
    %v2479 = vunpack.c.l.b16 %v2201
    %v2480 = vunpack.c.h.b16 %v2201
    %v2481 = vunpack.c.l.b16 %v2202
    %v2482 = vunpack.c.h.b16 %v2202
    %v2483 = vunpack.c.l.b16 %v2203
    %v2484 = vunpack.c.h.b16 %v2203
    %v2485 = vunpack.c.l.b16 %v2204
    %v2486 = vunpack.c.h.b16 %v2204
    %v2487 = vunpack.c.l.b16 %v2205
    %v2488 = vunpack.c.h.b16 %v2205
    %v2489 = vunpack.c.l.b16 %v2206
    %v2490 = vunpack.c.h.b16 %v2206
    %v2491 = vunpack.c.l.b16 %v2207
    %v2492 = vunpack.c.h.b16 %v2207
    %v2493 = vunpack.c.l.b16 %v2208
    %v2494 = vunpack.c.h.b16 %v2208
    %v2495 = vunpack.c.l.b16 %v2209
    %v2496 = vunpack.c.h.b16 %v2209
    %v2497 = vunpack.c.l.b16 %v2210
    %v2498 = vunpack.c.h.b16 %v2210
    %v2499 = vunpack.c.l.b16 %v2211
    %v2500 = vunpack.c.h.b16 %v2211
    %v2501 = vunpack.c.l.b16 %v2212
    %v2502 = vunpack.c.h.b16 %v2212
    %v2503 = vunpack.c.l.b16 %v2213
    %v2504 = vunpack.c.h.b16 %v2213
    %v2505 = vunpack.c.l.b16 %v2214
    %v2506 = vunpack.c.h.b16 %v2214
    %v2507 = vunpack.c.l.b16 %v2215
    %v2508 = vunpack.c.h.b16 %v2215
    %v2509 = vunpack.c.l.b16 %v2216
    %v2510 = vunpack.c.h.b16 %v2216
    %v2511 = vunpack.c.l.b16 %v2217
    %v2512 = vunpack.c.h.b16 %v2217
    %v2513 = vunpack.c.l.b16 %v2218
    %v2514 = vunpack.c.h.b16 %v2218
    %v2515 = vunpack.c.l.b16 %v2219
    %v2516 = vunpack.c.h.b16 %v2219
    %v2517 = vunpack.c.l.b16 %v2220
    %v2518 = vunpack.c.h.b16 %v2220
    %v2519 = vunpack.c.l.b16 %v2221
    %v2520 = vunpack.c.h.b16 %v2221
    %v2521 = vunpack.c.l.b16 %v2222
    %v2522 = vunpack.c.h.b16 %v2222
    %v2523 = vunpack.c.l.b16 %v2223
    %v2524 = vunpack.c.h.b16 %v2223
    %v2525 = vunpack.c.l.b16 %v2224
    %v2526 = vunpack.c.h.b16 %v2224
    %v2527 = vunpack.c.l.b16 %v2225
    %v2528 = vunpack.c.h.b16 %v2225
    %v2529 = vunpack.c.l.b16 %v2226
    %v2530 = vunpack.c.h.b16 %v2226
    %v2531 = vunpack.c.l.b16 %v2227
    %v2532 = vunpack.c.h.b16 %v2227
    %v2533 = vunpack.c.l.b16 %v2228
    %v2534 = vunpack.c.h.b16 %v2228
    %v2535 = vunpack.c.l.b16 %v2229
    %v2536 = vunpack.c.h.b16 %v2229
    %v2537 = vunpack.c.l.b16 %v2230
    %v2538 = vunpack.c.h.b16 %v2230
    %v2539 = vunpack.c.l.b16 %v2231
    %v2540 = vunpack.c.h.b16 %v2231
    %v2541 = vunpack.c.l.b16 %v2232
    %v2542 = vunpack.c.h.b16 %v2232
    %v2543 = vunpack.c.l.b16 %v2233
    %v2544 = vunpack.c.h.b16 %v2233
    %v2545 = vunpack.c.l.b16 %v2234
    %v2546 = vunpack.c.h.b16 %v2234
    %v2547 = vunpack.c.l.b16 %v2235
    %v2548 = vunpack.c.h.b16 %v2235
    %v2549 = vunpack.c.l.b16 %v2236
    %v2550 = vunpack.c.h.b16 %v2236
    %v2551 = vunpack.c.l.b16 %v2237
    %v2552 = vunpack.c.h.b16 %v2237
    %v2553 = vunpack.c.l.b16 %v2238
    %v2554 = vunpack.c.h.b16 %v2238
    %v2555 = vunpack.c.l.b16 %v2239
    %v2556 = vunpack.c.h.b16 %v2239
    %v2557 = vunpack.c.l.b16 %v2240
    %v2558 = vunpack.c.h.b16 %v2240
    %v2559 = vunpack.c.l.b16 %v2241
    %v2560 = vunpack.c.h.b16 %v2241
    %v2561 = vunpack.c.l.b16 %v2242
    %v2562 = vunpack.c.h.b16 %v2242
    %v2563 = vunpack.c.l.b16 %v2243
    %v2564 = vunpack.c.h.b16 %v2243
    %v2565 = vunpack.c.l.b16 %v2244
    %v2566 = vunpack.c.h.b16 %v2244
    %v2567 = vunpack.c.l.b16 %v2245
    %v2568 = vunpack.c.h.b16 %v2245
    %v2569 = vunpack.c.l.b16 %v2246
    %v2570 = vunpack.c.h.b16 %v2246
    %v2571 = vunpack.c.l.b16 %v2247
    %v2572 = vunpack.c.h.b16 %v2247
    %v2573 = vunpack.c.l.b16 %v2248
    %v2574 = vunpack.c.h.b16 %v2248
    %v2575 = vunpack.c.l.b16 %v2249
    %v2576 = vunpack.c.h.b16 %v2249
    %v2577 = vunpack.c.l.b16 %v2250
    %v2578 = vunpack.c.h.b16 %v2250
    %v2579 = vunpack.c.l.b16 %v2251
    %v2580 = vunpack.c.h.b16 %v2251
    %v2581 = vunpack.c.l.b16 %v2252
    %v2582 = vunpack.c.h.b16 %v2252
    %v2583 = vunpack.c.l.b16 %v2253
    %v2584 = vunpack.c.h.b16 %v2253
    %v2585 = vunpack.c.l.b16 %v2254
    %v2586 = vunpack.c.h.b16 %v2254
    %v2587 = vunpack.c.l.b16 %v2255
    %v2588 = vunpack.c.h.b16 %v2255
    %v2589 = vunpack.c.l.b16 %v2256
    %v2590 = vunpack.c.h.b16 %v2256
    %v2591 = vunpack.c.l.b16 %v2257
    %v2592 = vunpack.c.h.b16 %v2257
    %v2593 = vunpack.c.l.b16 %v2258
    %v2594 = vunpack.c.h.b16 %v2258
    %v2595 = vunpack.c.l.b16 %v2259
    %v2596 = vunpack.c.h.b16 %v2259
    %v2597 = vunpack.c.l.b16 %v2260
    %v2598 = vunpack.c.h.b16 %v2260
    %v2599 = vunpack.c.l.b16 %v2261
    %v2600 = vunpack.c.h.b16 %v2261
    %v2601 = vunpack.c.l.b16 %v2262
    %v2602 = vunpack.c.h.b16 %v2262
    %v2603 = vunpack.c.l.b16 %v2263
    %v2604 = vunpack.c.h.b16 %v2263
    %v2605 = vunpack.c.l.b16 %v2264
    %v2606 = vunpack.c.h.b16 %v2264
    %v2607 = vunpack.c.l.b16 %v2265
    %v2608 = vunpack.c.h.b16 %v2265
    %v2609 = vunpack.c.l.b16 %v2266
    %v2610 = vunpack.c.h.b16 %v2266
    %v2611 = vunpack.c.l.b16 %v2267
    %v2612 = vunpack.c.h.b16 %v2267
    %v2613 = vunpack.c.l.b16 %v2268
    %v2614 = vunpack.c.h.b16 %v2268
    %v2615 = vunpack.c.l.b16 %v2269
    %v2616 = vunpack.c.h.b16 %v2269
    %v2617 = vunpack.c.l.b16 %v2270
    %v2618 = vunpack.c.h.b16 %v2270
    %v2619 = vunpack.c.l.b16 %v2271
    %v2620 = vunpack.c.h.b16 %v2271
    %v2621 = vunpack.c.l.b16 %v2272
    %v2622 = vunpack.c.h.b16 %v2272
    %v2623 = vunpack.c.l.b16 %v2273
    %v2624 = vunpack.c.h.b16 %v2273
    %v2625 = vunpack.c.l.b16 %v2274
    %v2626 = vunpack.c.h.b16 %v2274
    %v2627 = vunpack.c.l.b16 %v2275
    %v2628 = vunpack.c.h.b16 %v2275
    %v2629 = vunpack.c.l.b16 %v2276
    %v2630 = vunpack.c.h.b16 %v2276
    %v2631 = vunpack.c.l.b16 %v2277
    %v2632 = vunpack.c.h.b16 %v2277
    %v2633 = vunpack.c.l.b16 %v2278
    %v2634 = vunpack.c.h.b16 %v2278
    %v2635 = vunpack.c.l.b16 %v2279
    %v2636 = vunpack.c.h.b16 %v2279
    %v2637 = vunpack.c.l.b16 %v2280
    %v2638 = vunpack.c.h.b16 %v2280
    %v2639 = vunpack.c.l.b16 %v2281
    %v2640 = vunpack.c.h.b16 %v2281
    %v2641 = vunpack.c.l.b16 %v2282
    %v2642 = vunpack.c.h.b16 %v2282
    %v2643 = vunpack.c.l.b16 %v2283
    %v2644 = vunpack.c.h.b16 %v2283
    %v2645 = vunpack.c.l.b16 %v2284
    %v2646 = vunpack.c.h.b16 %v2284
    %v2647 = vunpack.c.l.b16 %v2285
    %v2648 = vunpack.c.h.b16 %v2285
    %v2649 = vunpack.c.l.b16 %v2286
    %v2650 = vunpack.c.h.b16 %v2286
    %v2651 = vunpack.c.l.b16 %v2287
    %v2652 = vunpack.c.h.b16 %v2287
    %v2653 = vunpack.c.l.b16 %v2288
    %v2654 = vunpack.c.h.b16 %v2288
    %v2655 = vunpack.c.l.b16 %v2289
    %v2656 = vunpack.c.h.b16 %v2289
    %v2657 = vunpack.c.l.b16 %v2290
    %v2658 = vunpack.c.h.b16 %v2290
    %v2659 = vunpack.c.l.b16 %v2291
    %v2660 = vunpack.c.h.b16 %v2291
    %v2661 = vunpack.c.l.b16 %v2292
    %v2662 = vunpack.c.h.b16 %v2292
    %v2663 = vunpack.c.l.b16 %v2293
    %v2664 = vunpack.c.h.b16 %v2293
    %v2665 = vunpack.c.l.b16 %v2294
    %v2666 = vunpack.c.h.b16 %v2294
    %v2667 = vunpack.c.l.b16 %v2295
    %v2668 = vunpack.c.h.b16 %v2295
    %v2669 = vunpack.c.l.b16 %v2296
    %v2670 = vunpack.c.h.b16 %v2296
    %v2671 = vunpack.c.l.b16 %v2297
    %v2672 = vunpack.c.h.b16 %v2297
    %v2673 = vunpack.c.l.b16 %v2298
    %v2674 = vunpack.c.h.b16 %v2298
    %v2675 = vunpack.c.l.b16 %v2299
    %v2676 = vunpack.c.h.b16 %v2299
    %v2677 = vunpack.c.l.b16 %v2300
    %v2678 = vunpack.c.h.b16 %v2300
    %v2679 = vunpack.c.l.b16 %v2301
    %v2680 = vunpack.c.h.b16 %v2301
    %v2681 = vunpack.c.l.b16 %v2302
    %v2682 = vunpack.c.h.b16 %v2302
    %v2683 = vunpack.c.l.b16 %v2303
    %v2684 = vunpack.c.h.b16 %v2303
    %v2685 = vunpack.c.l.b16 %v2304
    %v2686 = vunpack.c.h.b16 %v2304
    %v2687 = vunpack.c.l.b16 %v2305
    %v2688 = vunpack.c.h.b16 %v2305
    %v2689 = vunpack.c.l.b16 %v2306
    %v2690 = vunpack.c.h.b16 %v2306
    %v2691 = vunpack.c.l.b16 %v2307
    %v2692 = vunpack.c.h.b16 %v2307
    %v2693 = vunpack.c.l.b16 %v2308
    %v2694 = vunpack.c.h.b16 %v2308
    %v2695 = vunpack.c.l.b16 %v2309
    %v2696 = vunpack.c.h.b16 %v2309
    %v2697 = vunpack.c.l.b16 %v2310
    %v2698 = vunpack.c.h.b16 %v2310
    %v2699 = vunpack.c.l.b16 %v2311
    %v2700 = vunpack.c.h.b16 %v2311
    %v2701 = vunpack.c.l.b16 %v2312
    %v2702 = vunpack.c.h.b16 %v2312
    %v2703 = vunpack.c.l.b16 %v2313
    %v2704 = vunpack.c.h.b16 %v2313
    %v2705 = vunpack.c.l.b16 %v2314
    %v2706 = vunpack.c.h.b16 %v2314
    %v2707 = vunpack.c.l.b16 %v2315
    %v2708 = vunpack.c.h.b16 %v2315
    %v2709 = vunpack.c.l.b16 %v2316
    %v2710 = vunpack.c.h.b16 %v2316
    %v2711 = vunpack.c.l.b16 %v2317
    %v2712 = vunpack.c.h.b16 %v2317
    %v2713 = vunpack.c.l.b16 %v2318
    %v2714 = vunpack.c.h.b16 %v2318
    %v2715 = vpack.c.b16 %v2461, %v2459
    %v2716 = vpack.c.b16 %v2462, %v2460
    %v2717 = vpack.c.b16 %v2465, %v2463
    %v2718 = vpack.c.b16 %v2466, %v2464
    %v2719 = vpack.c.b16 %v2469, %v2467
    %v2720 = vpack.c.b16 %v2470, %v2468
    %v2721 = vpack.c.b16 %v2473, %v2471
    %v2722 = vpack.c.b16 %v2474, %v2472
    %v2723 = vpack.c.b16 %v2477, %v2475
    %v2724 = vpack.c.b16 %v2478, %v2476
    %v2725 = vpack.c.b16 %v2481, %v2479
    %v2726 = vpack.c.b16 %v2482, %v2480
    %v2727 = vpack.c.b16 %v2485, %v2483
    %v2728 = vpack.c.b16 %v2486, %v2484
    %v2729 = vpack.c.b16 %v2489, %v2487
    %v2730 = vpack.c.b16 %v2490, %v2488
    %v2731 = vpack.c.b16 %v2493, %v2491
    %v2732 = vpack.c.b16 %v2494, %v2492
    %v2733 = vpack.c.b16 %v2497, %v2495
    %v2734 = vpack.c.b16 %v2498, %v2496
    %v2735 = vpack.c.b16 %v2501, %v2499
    %v2736 = vpack.c.b16 %v2502, %v2500
    %v2737 = vpack.c.b16 %v2505, %v2503
    %v2738 = vpack.c.b16 %v2506, %v2504
    %v2739 = vpack.c.b16 %v2509, %v2507
    %v2740 = vpack.c.b16 %v2510, %v2508
    %v2741 = vpack.c.b16 %v2513, %v2511
    %v2742 = vpack.c.b16 %v2514, %v2512
    %v2743 = vpack.c.b16 %v2517, %v2515
    %v2744 = vpack.c.b16 %v2518, %v2516
    %v2745 = vpack.c.b16 %v2521, %v2519
    %v2746 = vpack.c.b16 %v2522, %v2520
    %v2747 = vpack.c.b16 %v2525, %v2523
    %v2748 = vpack.c.b16 %v2526, %v2524
    %v2749 = vpack.c.b16 %v2529, %v2527
    %v2750 = vpack.c.b16 %v2530, %v2528
    %v2751 = vpack.c.b16 %v2533, %v2531
    %v2752 = vpack.c.b16 %v2534, %v2532
    %v2753 = vpack.c.b16 %v2537, %v2535
    %v2754 = vpack.c.b16 %v2538, %v2536
    %v2755 = vpack.c.b16 %v2541, %v2539
    %v2756 = vpack.c.b16 %v2542, %v2540
    %v2757 = vpack.c.b16 %v2545, %v2543
    %v2758 = vpack.c.b16 %v2546, %v2544
    %v2759 = vpack.c.b16 %v2549, %v2547
    %v2760 = vpack.c.b16 %v2550, %v2548
    %v2761 = vpack.c.b16 %v2553, %v2551
    %v2762 = vpack.c.b16 %v2554, %v2552
    %v2763 = vpack.c.b16 %v2557, %v2555
    %v2764 = vpack.c.b16 %v2558, %v2556
    %v2765 = vpack.c.b16 %v2561, %v2559
    %v2766 = vpack.c.b16 %v2562, %v2560
    %v2767 = vpack.c.b16 %v2565, %v2563
    %v2768 = vpack.c.b16 %v2566, %v2564
    %v2769 = vpack.c.b16 %v2569, %v2567
    %v2770 = vpack.c.b16 %v2570, %v2568
    %v2771 = vpack.c.b16 %v2573, %v2571
    %v2772 = vpack.c.b16 %v2574, %v2572
    %v2773 = vpack.c.b16 %v2577, %v2575
    %v2774 = vpack.c.b16 %v2578, %v2576
    %v2775 = vpack.c.b16 %v2581, %v2579
    %v2776 = vpack.c.b16 %v2582, %v2580
    %v2777 = vpack.c.b16 %v2585, %v2583
    %v2778 = vpack.c.b16 %v2586, %v2584
    %v2779 = vpack.c.b16 %v2589, %v2587
    %v2780 = vpack.c.b16 %v2590, %v2588
    %v2781 = vpack.c.b16 %v2593, %v2591
    %v2782 = vpack.c.b16 %v2594, %v2592
    %v2783 = vpack.c.b16 %v2597, %v2595
    %v2784 = vpack.c.b16 %v2598, %v2596
    %v2785 = vpack.c.b16 %v2601, %v2599
    %v2786 = vpack.c.b16 %v2602, %v2600
    %v2787 = vpack.c.b16 %v2605, %v2603
    %v2788 = vpack.c.b16 %v2606, %v2604
    %v2789 = vpack.c.b16 %v2609, %v2607
    %v2790 = vpack.c.b16 %v2610, %v2608
    %v2791 = vpack.c.b16 %v2613, %v2611
    %v2792 = vpack.c.b16 %v2614, %v2612
    %v2793 = vpack.c.b16 %v2617, %v2615
    %v2794 = vpack.c.b16 %v2618, %v2616
    %v2795 = vpack.c.b16 %v2621, %v2619
    %v2796 = vpack.c.b16 %v2622, %v2620
    %v2797 = vpack.c.b16 %v2625, %v2623
    %v2798 = vpack.c.b16 %v2626, %v2624
    %v2799 = vpack.c.b16 %v2629, %v2627
    %v2800 = vpack.c.b16 %v2630, %v2628
    %v2801 = vpack.c.b16 %v2633, %v2631
    %v2802 = vpack.c.b16 %v2634, %v2632
    %v2803 = vpack.c.b16 %v2637, %v2635
    %v2804 = vpack.c.b16 %v2638, %v2636
    %v2805 = vpack.c.b16 %v2641, %v2639
    %v2806 = vpack.c.b16 %v2642, %v2640
    %v2807 = vpack.c.b16 %v2645, %v2643
    %v2808 = vpack.c.b16 %v2646, %v2644
    %v2809 = vpack.c.b16 %v2649, %v2647
    %v2810 = vpack.c.b16 %v2650, %v2648
    %v2811 = vpack.c.b16 %v2653, %v2651
    %v2812 = vpack.c.b16 %v2654, %v2652
    %v2813 = vpack.c.b16 %v2657, %v2655
    %v2814 = vpack.c.b16 %v2658, %v2656
    %v2815 = vpack.c.b16 %v2661, %v2659
    %v2816 = vpack.c.b16 %v2662, %v2660
    %v2817 = vpack.c.b16 %v2665, %v2663
    %v2818 = vpack.c.b16 %v2666, %v2664
    %v2819 = vpack.c.b16 %v2669, %v2667
    %v2820 = vpack.c.b16 %v2670, %v2668
    %v2821 = vpack.c.b16 %v2673, %v2671
    %v2822 = vpack.c.b16 %v2674, %v2672
    %v2823 = vpack.c.b16 %v2677, %v2675
    %v2824 = vpack.c.b16 %v2678, %v2676
    %v2825 = vpack.c.b16 %v2681, %v2679
    %v2826 = vpack.c.b16 %v2682, %v2680
    %v2827 = vpack.c.b16 %v2685, %v2683
    %v2828 = vpack.c.b16 %v2686, %v2684
    %v2829 = vpack.c.b16 %v2689, %v2687
    %v2830 = vpack.c.b16 %v2690, %v2688
    %v2831 = vpack.c.b16 %v2693, %v2691
    %v2832 = vpack.c.b16 %v2694, %v2692
    %v2833 = vpack.c.b16 %v2697, %v2695
    %v2834 = vpack.c.b16 %v2698, %v2696
    %v2835 = vpack.c.b16 %v2701, %v2699
    %v2836 = vpack.c.b16 %v2702, %v2700
    %v2837 = vpack.c.b16 %v2705, %v2703
    %v2838 = vpack.c.b16 %v2706, %v2704
    %v2839 = vpack.c.b16 %v2709, %v2707
    %v2840 = vpack.c.b16 %v2710, %v2708
    %v2841 = vpack.c.b16 %v2713, %v2711
    %v2842 = vpack.c.b16 %v2714, %v2712
    %2971 = vmatprep.subr.bf16.mxu0 %v2730
    %2972 = vmatpush1.bf16.msra.mxu0 %v2729
    %2973 = vmatprep.subr.bf16.mxu0 %v2728
    %2974 = vmatpush1.bf16.msra.mxu0 %v2727
    %2975 = vmatprep.subr.bf16.mxu0 %v2726
    %2976 = vmatpush1.bf16.msra.mxu0 %v2725
    %2977 = vmatprep.subr.bf16.mxu0 %v2724
    %2978 = vmatpush1.bf16.msra.mxu0 %v2723
    %2979 = vmatprep.subr.bf16.mxu0 %v2722
    %2980 = vmatpush1.bf16.msra.mxu0 %v2721
    %2981 = vmatprep.subr.bf16.mxu0 %v2720
    %2982 = vmatpush1.bf16.msra.mxu0 %v2719
    %2983 = vmatprep.subr.bf16.mxu0 %v2718
    %2984 = vmatpush1.bf16.msra.mxu0 %v2717
    %2985 = vmatprep.subr.bf16.mxu0 %v2716
    %2986 = vmatpush1.bf16.msra.mxu0 %v2715
    %2987 = vmatprep.subr.bf16.mxu0 %v2746
    %2988 = vmatpush2.bf16.msra.mxu0 %v2745
    %2989 = vmatprep.subr.bf16.mxu0 %v2744
    %2990 = vmatpush2.bf16.msra.mxu0 %v2743
    %2991 = vmatprep.subr.bf16.mxu0 %v2742
    %2992 = vmatpush2.bf16.msra.mxu0 %v2741
    %2993 = vmatprep.subr.bf16.mxu0 %v2740
    %2994 = vmatpush2.bf16.msra.mxu0 %v2739
    %2995 = vmatprep.subr.bf16.mxu0 %v2738
    %2996 = vmatpush2.bf16.msra.mxu0 %v2737
    %2997 = vmatprep.subr.bf16.mxu0 %v2736
    %2998 = vmatpush2.bf16.msra.mxu0 %v2735
    %2999 = vmatprep.subr.bf16.mxu0 %v2734
    %3000 = vmatpush2.bf16.msra.mxu0 %v2733
    %3001 = vmatprep.subr.bf16.mxu0 %v2732
    %3002 = vmatpush2.bf16.msra.mxu0 %v2731
    %3003 = vmatprep.mubr.bf16.mxu0 %v2184
    %3004 = vmatmul.mubr.bf16.gmra.mxu0 %v2183
    %v3005 = vpop.f32.mrf.mxu0
    %v3006 = vadd.f32 %v2324, %v3005
    %v3007 = vpop.f32.mrf.mxu0
    %v3008 = vadd.f32 %v2328, %v3007
    %v3009 = vpop.f32.mrf.mxu0
    %v3010 = vpop.f32.mrf.mxu0
    %3011 = vdwg.mxu0
    %3012 = vmatprep.subr.bf16.mxu0 %v2762
    %3013 = vmatpush1.bf16.msra.mxu0 %v2761
    %3014 = vmatprep.subr.bf16.mxu0 %v2760
    %3015 = vmatpush1.bf16.msra.mxu0 %v2759
    %3016 = vmatprep.subr.bf16.mxu0 %v2758
    %3017 = vmatpush1.bf16.msra.mxu0 %v2757
    %3018 = vmatprep.subr.bf16.mxu0 %v2756
    %3019 = vmatpush1.bf16.msra.mxu0 %v2755
    %3020 = vmatprep.subr.bf16.mxu0 %v2754
    %3021 = vmatpush1.bf16.msra.mxu0 %v2753
    %3022 = vmatprep.subr.bf16.mxu0 %v2752
    %3023 = vmatpush1.bf16.msra.mxu0 %v2751
    %3024 = vmatprep.subr.bf16.mxu0 %v2750
    %3025 = vmatpush1.bf16.msra.mxu0 %v2749
    %3026 = vmatprep.subr.bf16.mxu0 %v2748
    %3027 = vmatpush1.bf16.msra.mxu0 %v2747
    %3028 = vmatprep.subr.bf16.mxu0 %v2778
    %3029 = vmatpush2.bf16.msra.mxu0 %v2777
    %3030 = vmatprep.subr.bf16.mxu0 %v2776
    %3031 = vmatpush2.bf16.msra.mxu0 %v2775
    %3032 = vmatprep.subr.bf16.mxu0 %v2774
    %3033 = vmatpush2.bf16.msra.mxu0 %v2773
    %3034 = vmatprep.subr.bf16.mxu0 %v2772
    %3035 = vmatpush2.bf16.msra.mxu0 %v2771
    %3036 = vmatprep.subr.bf16.mxu0 %v2770
    %3037 = vmatpush2.bf16.msra.mxu0 %v2769
    %3038 = vmatprep.subr.bf16.mxu0 %v2768
    %3039 = vmatpush2.bf16.msra.mxu0 %v2767
    %3040 = vmatprep.subr.bf16.mxu0 %v2766
    %3041 = vmatpush2.bf16.msra.mxu0 %v2765
    %3042 = vmatprep.subr.bf16.mxu0 %v2764
    %3043 = vmatpush2.bf16.msra.mxu0 %v2763
    %3044 = vmatprep.mubr.bf16.mxu0 %v2186
    %3045 = vmatmul.mubr.bf16.gmra.mxu0 %v2185
    %v3046 = vpop.f32.mrf.mxu0
    %v3047 = vadd.f32 %v3006, %v3046
    %v3048 = vpop.f32.mrf.mxu0
    %v3049 = vadd.f32 %v3008, %v3048
    %v3050 = vpop.f32.mrf.mxu0
    %v3051 = vpop.f32.mrf.mxu0
    %3052 = vdwg.mxu0
    %3053 = vmatprep.subr.bf16.mxu0 %v2794
    %3054 = vmatpush1.bf16.msra.mxu0 %v2793
    %3055 = vmatprep.subr.bf16.mxu0 %v2792
    %3056 = vmatpush1.bf16.msra.mxu0 %v2791
    %3057 = vmatprep.subr.bf16.mxu0 %v2790
    %3058 = vmatpush1.bf16.msra.mxu0 %v2789
    %3059 = vmatprep.subr.bf16.mxu0 %v2788
    %3060 = vmatpush1.bf16.msra.mxu0 %v2787
    %3061 = vmatprep.subr.bf16.mxu0 %v2786
    %3062 = vmatpush1.bf16.msra.mxu0 %v2785
    %3063 = vmatprep.subr.bf16.mxu0 %v2784
    %3064 = vmatpush1.bf16.msra.mxu0 %v2783
    %3065 = vmatprep.subr.bf16.mxu0 %v2782
    %3066 = vmatpush1.bf16.msra.mxu0 %v2781
    %3067 = vmatprep.subr.bf16.mxu0 %v2780
    %3068 = vmatpush1.bf16.msra.mxu0 %v2779
    %3069 = vmatprep.subr.bf16.mxu0 %v2810
    %3070 = vmatpush2.bf16.msra.mxu0 %v2809
    %3071 = vmatprep.subr.bf16.mxu0 %v2808
    %3072 = vmatpush2.bf16.msra.mxu0 %v2807
    %3073 = vmatprep.subr.bf16.mxu0 %v2806
    %3074 = vmatpush2.bf16.msra.mxu0 %v2805
    %3075 = vmatprep.subr.bf16.mxu0 %v2804
    %3076 = vmatpush2.bf16.msra.mxu0 %v2803
    %3077 = vmatprep.subr.bf16.mxu0 %v2802
    %3078 = vmatpush2.bf16.msra.mxu0 %v2801
    %3079 = vmatprep.subr.bf16.mxu0 %v2800
    %3080 = vmatpush2.bf16.msra.mxu0 %v2799
    %3081 = vmatprep.subr.bf16.mxu0 %v2798
    %3082 = vmatpush2.bf16.msra.mxu0 %v2797
    %3083 = vmatprep.subr.bf16.mxu0 %v2796
    %3084 = vmatpush2.bf16.msra.mxu0 %v2795
    %3085 = vmatprep.mubr.bf16.mxu0 %v2188
    %3086 = vmatmul.mubr.bf16.gmra.mxu0 %v2187
    %v3087 = vpop.f32.mrf.mxu0
    %v3088 = vadd.f32 %v3047, %v3087
    %v3089 = vpop.f32.mrf.mxu0
    %v3090 = vadd.f32 %v3049, %v3089
    %v3091 = vpop.f32.mrf.mxu0
    %v3092 = vpop.f32.mrf.mxu0
    %3093 = vdwg.mxu0
    %3094 = vmatprep.subr.bf16.mxu0 %v2826
    %3095 = vmatpush1.bf16.msra.mxu0 %v2825
    %3096 = vmatprep.subr.bf16.mxu0 %v2824
    %3097 = vmatpush1.bf16.msra.mxu0 %v2823
    %3098 = vmatprep.subr.bf16.mxu0 %v2822
    %3099 = vmatpush1.bf16.msra.mxu0 %v2821
    %3100 = vmatprep.subr.bf16.mxu0 %v2820
    %3101 = vmatpush1.bf16.msra.mxu0 %v2819
    %3102 = vmatprep.subr.bf16.mxu0 %v2818
    %3103 = vmatpush1.bf16.msra.mxu0 %v2817
    %3104 = vmatprep.subr.bf16.mxu0 %v2816
    %3105 = vmatpush1.bf16.msra.mxu0 %v2815
    %3106 = vmatprep.subr.bf16.mxu0 %v2814
    %3107 = vmatpush1.bf16.msra.mxu0 %v2813
    %3108 = vmatprep.subr.bf16.mxu0 %v2812
    %3109 = vmatpush1.bf16.msra.mxu0 %v2811
    %3110 = vmatprep.subr.bf16.mxu0 %v2842
    %3111 = vmatpush2.bf16.msra.mxu0 %v2841
    %3112 = vmatprep.subr.bf16.mxu0 %v2840
    %3113 = vmatpush2.bf16.msra.mxu0 %v2839
    %3114 = vmatprep.subr.bf16.mxu0 %v2838
    %3115 = vmatpush2.bf16.msra.mxu0 %v2837
    %3116 = vmatprep.subr.bf16.mxu0 %v2836
    %3117 = vmatpush2.bf16.msra.mxu0 %v2835
    %3118 = vmatprep.subr.bf16.mxu0 %v2834
    %3119 = vmatpush2.bf16.msra.mxu0 %v2833
    %3120 = vmatprep.subr.bf16.mxu0 %v2832
    %3121 = vmatpush2.bf16.msra.mxu0 %v2831
    %3122 = vmatprep.subr.bf16.mxu0 %v2830
    %3123 = vmatpush2.bf16.msra.mxu0 %v2829
    %3124 = vmatprep.subr.bf16.mxu0 %v2828
    %3125 = vmatpush2.bf16.msra.mxu0 %v2827
    %3126 = vmatprep.mubr.bf16.mxu0 %v2190
    %3127 = vmatmul.mubr.bf16.gmra.mxu0 %v2189
    %v3128 = vpop.f32.mrf.mxu0
    %v3129 = vadd.f32 %v3088, %v3128
    %v3130 = vpop.f32.mrf.mxu0
    %v3131 = vadd.f32 %v3090, %v3130
    %v3132 = vpop.f32.mrf.mxu0
    %v3133 = vpop.f32.mrf.mxu0
    %3134 = vdwg.mxu0
    %v3135 = vxor.u32 %v3129, 2147483648
    %v3136 = vxor.u32 %v3131, 2147483648
    %v3137 = vmul.f32 %v3135, 1.442695
    %v3138 = vpow.pop %v3137
    %v3139 = vmul.f32 %v3136, 1.442695
    %v3140 = vpow.pop %v3139
    %v3141 = vadd.f32 %v3138, 1.0
    %v3142 = vadd.f32 %v3140, 1.0
    %v3143 = vrcp.pop %v3141
    %v3144 = vmul.f32 1.0, %v3143
    %v3145 = vrcp.pop %v3142
    %v3146 = vmul.f32 1.0, %v3145
    %3147 = vst [vmem:[#allocation13] sm:$0xff] %v3144
    %3148 = vst [vmem:[#allocation13 + $0x8] sm:$0xff] %v3146
    // Predicated region
    $region54: #{tpu_custom_call.1} parent=1 // pred_check
      _
    $region55: #{tpu_custom_call.1} parent=1 // pred_check_branch
      %3150 = sbr.rel (0) target = $region57
    $region56: #{tpu_custom_call.1} parent=1 // pred_region
      %s3152 = ssub.s32 256, 256
      %3153 = vsyncadd [#allocation4], %s3152
      %s3155 = sshll.u32 [#allocation13], 4
      %s3156 = int_to_ptr.vmem [resolvable:$true] %s3155
      %3158 = dma.vmem_to_hbm [thread:$0]  %s3156, 256, %s7, [#allocation4]
    $region57: #{tpu_custom_call.1} parent=1 // pred_fallthru
      _
    // Predicated region
    $region58: #{tpu_custom_call.1} parent=1 // pred_check
      _
    $region59: #{tpu_custom_call.1} parent=1 // pred_check_branch
      %3160 = sbr.rel (0) target = $region61
    $region60: #{tpu_custom_call.1} parent=1 // pred_region
      %3161 = dma.done [#allocation4], 256
    $region61: #{tpu_custom_call.1} parent=1 // pred_fallthru
      _
    %3162 = vsyncpa [#allocation3], 1
    %3163 = vsyncpa [#allocation6], 1
    %3164 = vsyncpa [#allocation9], 1
    %3165 = vsyncpa [#allocation12], 1
    %3166 = vsyncpa [#allocation4], 1

</llo_original>
